<compile_context>
chip_gen: v7x
topology: tpu7x:2x2x1
jax: 0.10.0
libtpu: 0.0.40
codegen_flags: <defaults>
</compile_context>

<pallas_src>
import functools

import jax
import jax.numpy as jnp
from jax.experimental import pallas as pl
from jax.experimental.pallas import tpu as pltpu

EPS = 1e-5
LANE = 128


def _round_up(n, m):
    return ((n + m - 1) // m) * m


# --------------------------------------------------------------------------- #
# Kernel
# --------------------------------------------------------------------------- #
def dqn_kernel(x_ref, w1_ref, w2r_ref, w3_ref, w4_ref, wo_ref, vec_ref,
               out_ref, *, hidden_size):
    hp = w3_ref.shape[0]          # padded hidden width (multiple of 128)
    op = wo_ref.shape[1]          # padded output width (multiple of 128)
    inv_n = 1.0 / float(hidden_size)

    # Packed row vectors (biases / LN gamma / LN beta), f32.
    vec = vec_ref[...]

    def ln_relu(h, g_row, b_row):
        # Pad lanes of h are exact zeros (zero weight pad-columns + zero pad
        # bias), so sums over all hp lanes equal sums over the real lanes.
        mean = jnp.sum(h, axis=-1, keepdims=True) * inv_n
        var = jnp.sum(h * h, axis=-1, keepdims=True) * inv_n - mean * mean
        var = jnp.maximum(var, 0.0)                 # guard cancellation negatives
        # pad lanes: gamma = beta = 0  ->  output pad lanes stay exactly 0
        y = (h - mean) * jax.lax.rsqrt(var + EPS) * g_row + b_row
        return jnp.maximum(y, 0.0)

    def bf16(a):
        return a.astype(jnp.bfloat16)

    x = bf16(x_ref[...])

    # block 1
    h1 = jnp.dot(x, w1_ref[...], preferred_element_type=jnp.float32) + vec[0:1, :hp]
    x1b = bf16(ln_relu(h1, vec[1:2, :hp], vec[2:3, :hp]))

    # block 2 + residual branch off x1, fused into ONE (hp, 2*hp) GEMM
    # (dropout = identity in eval mode); split is static and lane-aligned.
    h2r = jnp.dot(x1b, w2r_ref[...], preferred_element_type=jnp.float32)
    h2 = h2r[:, :hp] + vec[3:4, :hp]
    res = h2r[:, hp:] + vec[6:7, :hp]
    x2 = ln_relu(h2, vec[4:5, :hp], vec[5:6, :hp]) + res

    # block 3
    h3 = jnp.dot(bf16(x2), w3_ref[...], preferred_element_type=jnp.float32) + vec[7:8, :hp]
    x3 = ln_relu(h3, vec[8:9, :hp], vec[9:10, :hp])

    # block 4
    h4 = jnp.dot(bf16(x3), w4_ref[...], preferred_element_type=jnp.float32) + vec[10:11, :hp]
    x4 = ln_relu(h4, vec[11:12, :hp], vec[12:13, :hp])

    # output layer — lane-dense padded width; real columns sliced in the wrapper
    out = jnp.dot(bf16(x4), wo_ref[...], preferred_element_type=jnp.float32) + vec[13:14, :op]
    out_ref[...] = out.astype(out_ref.dtype)


# --------------------------------------------------------------------------- #
# Wrapper
# --------------------------------------------------------------------------- #
def dqn_forward(x, packed, hidden_size, output_size, *, tile_b=None):
    B, in_dim = x.shape
    hp = packed["w3"].shape[0]
    op = packed["wo"].shape[1]

    if tile_b is None:
        if B < 64:
            tile_b = B                              # one grid step, no pipeline overhead
        elif B <= 256:
            tile_b = _round_up((B + 1) // 2, 16)    # grid=(2,): both v7x TensorCores
        else:
            tile_b = 128                            # v5e-friendly (avoid spill/vst pressure)

    # Pad batch to a tile multiple (robust to odd batch sizes).
    Bp = _round_up(B, tile_b)
    if Bp != B:
        x = jnp.pad(x, ((0, Bp - B), (0, 0)))
    grid = (Bp // tile_b,)

    args = (x, packed["w1"], packed["w2r"], packed["w3"], packed["w4"],
            packed["wo"], packed["vec"])
    kernel = functools.partial(dqn_kernel, hidden_size=hidden_size)

    # Advisory cost estimate for XLA scheduling around this custom call.
    flops = 2 * Bp * hp * (in_dim + 2 * hp + hp + hp + op)
    bytes_accessed = sum(int(a.size) * a.dtype.itemsize for a in args) + Bp * op * 4
    cost = pl.CostEstimate(flops=flops, transcendentals=4 * Bp,
                           bytes_accessed=bytes_accessed)

    weight_bytes = sum(int(a.size) * a.dtype.itemsize for a in args[1:])

    def call(single_buffer_weights):
        def const_spec(arr):
            # Constant index map: fetched exactly once -> no need to double-buffer.
            if single_buffer_weights:
                return pl.BlockSpec(arr.shape, lambda i: (0, 0),
                                    pipeline_mode=pl.Buffered(1))
            return pl.BlockSpec(arr.shape, lambda i: (0, 0))

        in_specs = [pl.BlockSpec((tile_b, in_dim), lambda i: (i, 0))]  # x, batch-tiled
        in_specs += [const_spec(a) for a in args[1:]]

        # Re-derived VMEM need (only raise the scoped limit when it matters,
        # e.g. large hidden sizes on v7x's 64 MiB VMEM).
        need = (weight_bytes * (1 if single_buffer_weights else 2)
                + 2 * tile_b * (in_dim + op) * 4      # double-buffered x / out tiles
                + 10 * tile_b * hp * 4)               # live f32 intermediates headroom
        vmem_limit = min(need + (4 << 20), 128 << 20) if need > (28 << 20) else None

        return pl.pallas_call(
            kernel,
            out_shape=jax.ShapeDtypeStruct((Bp, op), jnp.float32),
            grid_spec=pltpu.PrefetchScalarGridSpec(
                num_scalar_prefetch=0,
                grid=grid,
                in_specs=in_specs,
                out_specs=pl.BlockSpec((tile_b, op), lambda i: (i, 0)),
            ),
            compiler_params=pltpu.CompilerParams(
                dimension_semantics=("parallel",),
                vmem_limit_bytes=vmem_limit),
            cost_estimate=cost,
        )(*args)

    try:
        out_padded = call(True)
    except Exception:
        # pipeline_mode=pl.Buffered(1) unsupported on this jax version/backend:
        # fall back to default double-buffered constant blocks (correctness identical).
        out_padded = call(False)

    return out_padded[:B, :output_size]


# --------------------------------------------------------------------------- #
# Parameter init (PyTorch-like) and one-time packing / padding
# --------------------------------------------------------------------------- #
def init_params(key, input_size, hidden_size, output_size):
    ks = jax.random.split(key, 6)

    def lin(k, fan_in, fan_out):
        bound = float(fan_in) ** -0.5
        kw, kb = jax.random.split(k)
        w = jax.random.uniform(kw, (fan_in, fan_out), jnp.float32, -bound, bound)
        b = jax.random.uniform(kb, (fan_out,), jnp.float32, -bound, bound)
        return w, b

    p = {}
    p["w1"], p["b1"] = lin(ks[0], input_size, hidden_size)
    p["w2"], p["b2"] = lin(ks[1], hidden_size, hidden_size)
    p["wr"], p["br"] = lin(ks[2], hidden_size, hidden_size)
    p["w3"], p["b3"] = lin(ks[3], hidden_size, hidden_size)
    p["w4"], p["b4"] = lin(ks[4], hidden_size, hidden_size)
    p["wo"], p["bo"] = lin(ks[5], hidden_size, output_size)
    for n in ("1", "2", "3", "4"):        # LayerNorm defaults: gamma=1, beta=0
        p["g" + n] = jnp.ones((hidden_size,), jnp.float32)
        p["be" + n] = jnp.zeros((hidden_size,), jnp.float32)
    return p


def pack_params(p, input_size, hidden_size, output_size):
    """Pad feature dims to 128 lanes (zeros), store weights as bf16, fuse the
    block-2 / residual weights column-wise, and pack the 14 row-vector params
    into one (16, max(hp, op)) f32 array."""
    hp = _round_up(hidden_size, LANE)
    op = _round_up(output_size, LANE)
    vp = max(hp, op)

    def pad2(w, rows, cols):
        return jnp.pad(w, ((0, rows - w.shape[0]), (0, cols - w.shape[1])))

    w2p = pad2(p["w2"], hp, hp)
    wrp = pad2(p["wr"], hp, hp)
    packed = {
        "w1": pad2(p["w1"], input_size, hp).astype(jnp.bfloat16),
        # block-2 and residual weights fused -> one (hp, 2*hp) GEMM in the kernel
        "w2r": jnp.concatenate([w2p, wrp], axis=1).astype(jnp.bfloat16),
        "w3": pad2(p["w3"], hp, hp).astype(jnp.bfloat16),
        "w4": pad2(p["w4"], hp, hp).astype(jnp.bfloat16),
        "wo": pad2(p["wo"], hp, op).astype(jnp.bfloat16),
    }

    rows = [p["b1"], p["g1"], p["be1"],
            p["b2"], p["g2"], p["be2"],
            p["br"],
            p["b3"], p["g3"], p["be3"],
            p["b4"], p["g4"], p["be4"],
            p["bo"]]
    vec = jnp.zeros((16, vp), jnp.float32)
    for k, r in enumerate(rows):
        vec = vec.at[k, : r.shape[-1]].set(r.reshape(-1))
    packed["vec"] = vec
    return packed


# --------------------------------------------------------------------------- #
# Pure-JAX reference (module semantics)
# --------------------------------------------------------------------------- #
def dqn_reference(x, p, *, bf16_matmul=False):
    def mm(a, w):
        if bf16_matmul:
            return jnp.dot(a.astype(jnp.bfloat16), w.astype(jnp.bfloat16),
                           preferred_element_type=jnp.float32)
        return jnp.dot(a, w, preferred_element_type=jnp.float32)

    def ln(h, g, b):
        m = jnp.mean(h, -1, keepdims=True)
        v = jnp.mean((h - m) ** 2, -1, keepdims=True)
        return (h - m) * jax.lax.rsqrt(v + EPS) * g + b

    x1 = jax.nn.relu(ln(mm(x, p["w1"]) + p["b1"], p["g1"], p["be1"]))
    x2 = jax.nn.relu(ln(mm(x1, p["w2"]) + p["b2"], p["g2"], p["be2"]))
    x2 = x2 + (mm(x1, p["wr"]) + p["br"])
    x3 = jax.nn.relu(ln(mm(x2, p["w3"]) + p["b3"], p["g3"], p["be3"]))
    x4 = jax.nn.relu(ln(mm(x3, p["w4"]) + p["b4"], p["g4"], p["be4"]))
    return mm(x4, p["wo"]) + p["bo"]


if __name__ == "__main__":
    key = jax.random.PRNGKey(0)
    k_x, k_p = jax.random.split(key)

    batch, input_size, hidden_size, output_size = 16, 16, 32, 8
    x = jax.random.normal(k_x, (batch, input_size), jnp.float32)
    params = init_params(k_p, input_size, hidden_size, output_size)
    packed = pack_params(params, input_size, hidden_size, output_size)

    out = dqn_forward(x, packed, hidden_size, output_size)
    out = jax.block_until_ready(out)

    ref_bf16 = dqn_reference(x, params, bf16_matmul=True)   # same matmul precision
    ref_f32 = dqn_reference(x, params)                       # exact module math

    assert out.shape == (batch, output_size)
    assert jnp.allclose(out, ref_bf16, atol=2e-2, rtol=2e-2), "mismatch vs bf16 reference"
    assert jnp.allclose(out, ref_f32, atol=5e-2, rtol=5e-2), "mismatch vs f32 reference"
    print("KERNEL_OK")
</pallas_src>

<mosaic_0001>
module attributes {stable_mosaic.version = 11 : i64} {
  func.func @dqn_kernel(%arg0: i32, %arg1: memref<16x16xf32, #tpu.memory_space<vmem>>, %arg2: memref<16x128xbf16, #tpu.memory_space<vmem>>, %arg3: memref<128x256xbf16, #tpu.memory_space<vmem>>, %arg4: memref<128x128xbf16, #tpu.memory_space<vmem>>, %arg5: memref<128x128xbf16, #tpu.memory_space<vmem>>, %arg6: memref<128x128xbf16, #tpu.memory_space<vmem>>, %arg7: memref<16x128xf32, #tpu.memory_space<vmem>>, %arg8: memref<16x128xf32, #tpu.memory_space<vmem>>) attributes {dimension_semantics = [#tpu.dimension_semantics<parallel>], iteration_bounds = array<i64: 1>, scalar_prefetch = 0 : i64, scratch_operands = 0 : i64, tpu.core_type = #tpu.core_type<tc>, window_params = [{transform_indices = @transform_0, window_bounds = array<i64: 16, 16>}, {pipeline_mode = #tpu.pipeline_mode<synchronous>, transform_indices = @transform_1, window_bounds = array<i64: 16, 128>}, {pipeline_mode = #tpu.pipeline_mode<synchronous>, transform_indices = @transform_2, window_bounds = array<i64: 128, 256>}, {pipeline_mode = #tpu.pipeline_mode<synchronous>, transform_indices = @transform_3, window_bounds = array<i64: 128, 128>}, {pipeline_mode = #tpu.pipeline_mode<synchronous>, transform_indices = @transform_4, window_bounds = array<i64: 128, 128>}, {pipeline_mode = #tpu.pipeline_mode<synchronous>, transform_indices = @transform_5, window_bounds = array<i64: 128, 128>}, {pipeline_mode = #tpu.pipeline_mode<synchronous>, transform_indices = @transform_6, window_bounds = array<i64: 16, 128>}, {transform_indices = @transform_7, window_bounds = array<i64: 16, 128>}]} {
    %c0 = arith.constant 0 : index
    %c0_0 = arith.constant 0 : index
    %0 = vector.load %arg7[%c0, %c0_0] : memref<16x128xf32, #tpu.memory_space<vmem>>, vector<16x128xf32>
    %c0_1 = arith.constant 0 : index
    %c0_2 = arith.constant 0 : index
    %1 = vector.load %arg1[%c0_1, %c0_2] : memref<16x16xf32, #tpu.memory_space<vmem>>, vector<16x16xf32>
    %2 = arith.truncf %1 : vector<16x16xf32> to vector<16x16xbf16>
    %c0_3 = arith.constant 0 : index
    %c0_4 = arith.constant 0 : index
    %3 = vector.load %arg2[%c0_3, %c0_4] : memref<16x128xbf16, #tpu.memory_space<vmem>>, vector<16x128xbf16>
    %cst = arith.constant dense<0.000000e+00> : vector<16x128xf32>
    %4 = tpu.matmul %2, %3, %cst {dimension_numbers = #tpu.dot_dimension_numbers<[1], [0], [0], [1], [0, 0, 1, 1], [], []>} : vector<16x16xbf16>, vector<16x128xbf16>, vector<16x128xf32> -> vector<16x128xf32>
    %5 = vector.extract_strided_slice %0 {offsets = [0, 0], sizes = [1, 128], strides = [1, 1]} : vector<16x128xf32> to vector<1x128xf32>
    %6 = vector.broadcast %5 : vector<1x128xf32> to vector<16x128xf32>
    %7 = arith.addf %4, %6 : vector<16x128xf32>
    %8 = vector.extract_strided_slice %0 {offsets = [1, 0], sizes = [1, 128], strides = [1, 1]} : vector<16x128xf32> to vector<1x128xf32>
    %9 = vector.extract_strided_slice %0 {offsets = [2, 0], sizes = [1, 128], strides = [1, 1]} : vector<16x128xf32> to vector<1x128xf32>
    %cst_5 = arith.constant dense<0.000000e+00> : vector<16xf32>
    %10 = vector.multi_reduction <add>, %7, %cst_5 [1] : vector<16x128xf32> to vector<16xf32>
    %11 = vector.shape_cast %10 : vector<16xf32> to vector<16x1xf32>
    %cst_6 = arith.constant 3.125000e-02 : f32
    %12 = vector.broadcast %cst_6 : f32 to vector<16x1xf32>
    %13 = arith.mulf %11, %12 : vector<16x1xf32>
    %14 = arith.mulf %7, %7 : vector<16x128xf32>
    %cst_7 = arith.constant dense<0.000000e+00> : vector<16xf32>
    %15 = vector.multi_reduction <add>, %14, %cst_7 [1] : vector<16x128xf32> to vector<16xf32>
    %16 = vector.shape_cast %15 : vector<16xf32> to vector<16x1xf32>
    %cst_8 = arith.constant 3.125000e-02 : f32
    %17 = vector.broadcast %cst_8 : f32 to vector<16x1xf32>
    %18 = arith.mulf %16, %17 : vector<16x1xf32>
    %19 = arith.mulf %13, %13 : vector<16x1xf32>
    %20 = arith.subf %18, %19 : vector<16x1xf32>
    %cst_9 = arith.constant 0.000000e+00 : f32
    %21 = vector.broadcast %cst_9 : f32 to vector<16x1xf32>
    %22 = arith.maximumf %20, %21 : vector<16x1xf32>
    %23 = vector.broadcast %13 : vector<16x1xf32> to vector<16x128xf32>
    %24 = arith.subf %7, %23 : vector<16x128xf32>
    %cst_10 = arith.constant 9.99999974E-6 : f32
    %25 = vector.broadcast %cst_10 : f32 to vector<16x1xf32>
    %26 = arith.addf %22, %25 : vector<16x1xf32>
    %27 = math.rsqrt %26 : vector<16x1xf32>
    %28 = vector.broadcast %27 : vector<16x1xf32> to vector<16x128xf32>
    %29 = arith.mulf %24, %28 : vector<16x128xf32>
    %30 = vector.broadcast %8 : vector<1x128xf32> to vector<16x128xf32>
    %31 = arith.mulf %29, %30 : vector<16x128xf32>
    %32 = vector.broadcast %9 : vector<1x128xf32> to vector<16x128xf32>
    %33 = arith.addf %31, %32 : vector<16x128xf32>
    %cst_11 = arith.constant 0.000000e+00 : f32
    %34 = vector.broadcast %cst_11 : f32 to vector<16x128xf32>
    %35 = arith.maximumf %33, %34 : vector<16x128xf32>
    %36 = arith.truncf %35 : vector<16x128xf32> to vector<16x128xbf16>
    %c0_12 = arith.constant 0 : index
    %c0_13 = arith.constant 0 : index
    %37 = vector.load %arg3[%c0_12, %c0_13] : memref<128x256xbf16, #tpu.memory_space<vmem>>, vector<128x256xbf16>
    %cst_14 = arith.constant dense<0.000000e+00> : vector<16x256xf32>
    %38 = tpu.matmul %36, %37, %cst_14 {dimension_numbers = #tpu.dot_dimension_numbers<[1], [0], [0], [1], [0, 0, 1, 1], [], []>} : vector<16x128xbf16>, vector<128x256xbf16>, vector<16x256xf32> -> vector<16x256xf32>
    %39 = vector.extract_strided_slice %38 {offsets = [0, 0], sizes = [16, 128], strides = [1, 1]} : vector<16x256xf32> to vector<16x128xf32>
    %40 = vector.extract_strided_slice %0 {offsets = [3, 0], sizes = [1, 128], strides = [1, 1]} : vector<16x128xf32> to vector<1x128xf32>
    %41 = vector.broadcast %40 : vector<1x128xf32> to vector<16x128xf32>
    %42 = arith.addf %39, %41 : vector<16x128xf32>
    %43 = vector.extract_strided_slice %38 {offsets = [0, 128], sizes = [16, 128], strides = [1, 1]} : vector<16x256xf32> to vector<16x128xf32>
    %44 = vector.extract_strided_slice %0 {offsets = [6, 0], sizes = [1, 128], strides = [1, 1]} : vector<16x128xf32> to vector<1x128xf32>
    %45 = vector.broadcast %44 : vector<1x128xf32> to vector<16x128xf32>
    %46 = arith.addf %43, %45 : vector<16x128xf32>
    %47 = vector.extract_strided_slice %0 {offsets = [4, 0], sizes = [1, 128], strides = [1, 1]} : vector<16x128xf32> to vector<1x128xf32>
    %48 = vector.extract_strided_slice %0 {offsets = [5, 0], sizes = [1, 128], strides = [1, 1]} : vector<16x128xf32> to vector<1x128xf32>
    %cst_15 = arith.constant dense<0.000000e+00> : vector<16xf32>
    %49 = vector.multi_reduction <add>, %42, %cst_15 [1] : vector<16x128xf32> to vector<16xf32>
    %50 = vector.shape_cast %49 : vector<16xf32> to vector<16x1xf32>
    %cst_16 = arith.constant 3.125000e-02 : f32
    %51 = vector.broadcast %cst_16 : f32 to vector<16x1xf32>
    %52 = arith.mulf %50, %51 : vector<16x1xf32>
    %53 = arith.mulf %42, %42 : vector<16x128xf32>
    %cst_17 = arith.constant dense<0.000000e+00> : vector<16xf32>
    %54 = vector.multi_reduction <add>, %53, %cst_17 [1] : vector<16x128xf32> to vector<16xf32>
    %55 = vector.shape_cast %54 : vector<16xf32> to vector<16x1xf32>
    %cst_18 = arith.constant 3.125000e-02 : f32
    %56 = vector.broadcast %cst_18 : f32 to vector<16x1xf32>
    %57 = arith.mulf %55, %56 : vector<16x1xf32>
    %58 = arith.mulf %52, %52 : vector<16x1xf32>
    %59 = arith.subf %57, %58 : vector<16x1xf32>
    %cst_19 = arith.constant 0.000000e+00 : f32
    %60 = vector.broadcast %cst_19 : f32 to vector<16x1xf32>
    %61 = arith.maximumf %59, %60 : vector<16x1xf32>
    %62 = vector.broadcast %52 : vector<16x1xf32> to vector<16x128xf32>
    %63 = arith.subf %42, %62 : vector<16x128xf32>
    %cst_20 = arith.constant 9.99999974E-6 : f32
    %64 = vector.broadcast %cst_20 : f32 to vector<16x1xf32>
    %65 = arith.addf %61, %64 : vector<16x1xf32>
    %66 = math.rsqrt %65 : vector<16x1xf32>
    %67 = vector.broadcast %66 : vector<16x1xf32> to vector<16x128xf32>
    %68 = arith.mulf %63, %67 : vector<16x128xf32>
    %69 = vector.broadcast %47 : vector<1x128xf32> to vector<16x128xf32>
    %70 = arith.mulf %68, %69 : vector<16x128xf32>
    %71 = vector.broadcast %48 : vector<1x128xf32> to vector<16x128xf32>
    %72 = arith.addf %70, %71 : vector<16x128xf32>
    %cst_21 = arith.constant 0.000000e+00 : f32
    %73 = vector.broadcast %cst_21 : f32 to vector<16x128xf32>
    %74 = arith.maximumf %72, %73 : vector<16x128xf32>
    %75 = arith.addf %74, %46 : vector<16x128xf32>
    %76 = arith.truncf %75 : vector<16x128xf32> to vector<16x128xbf16>
    %c0_22 = arith.constant 0 : index
    %c0_23 = arith.constant 0 : index
    %77 = vector.load %arg4[%c0_22, %c0_23] : memref<128x128xbf16, #tpu.memory_space<vmem>>, vector<128x128xbf16>
    %cst_24 = arith.constant dense<0.000000e+00> : vector<16x128xf32>
    %78 = tpu.matmul %76, %77, %cst_24 {dimension_numbers = #tpu.dot_dimension_numbers<[1], [0], [0], [1], [0, 0, 1, 1], [], []>} : vector<16x128xbf16>, vector<128x128xbf16>, vector<16x128xf32> -> vector<16x128xf32>
    %79 = vector.extract_strided_slice %0 {offsets = [7, 0], sizes = [1, 128], strides = [1, 1]} : vector<16x128xf32> to vector<1x128xf32>
    %80 = vector.broadcast %79 : vector<1x128xf32> to vector<16x128xf32>
    %81 = arith.addf %78, %80 : vector<16x128xf32>
    %82 = vector.extract_strided_slice %0 {offsets = [8, 0], sizes = [1, 128], strides = [1, 1]} : vector<16x128xf32> to vector<1x128xf32>
    %83 = vector.extract_strided_slice %0 {offsets = [9, 0], sizes = [1, 128], strides = [1, 1]} : vector<16x128xf32> to vector<1x128xf32>
    %cst_25 = arith.constant dense<0.000000e+00> : vector<16xf32>
    %84 = vector.multi_reduction <add>, %81, %cst_25 [1] : vector<16x128xf32> to vector<16xf32>
    %85 = vector.shape_cast %84 : vector<16xf32> to vector<16x1xf32>
    %cst_26 = arith.constant 3.125000e-02 : f32
    %86 = vector.broadcast %cst_26 : f32 to vector<16x1xf32>
    %87 = arith.mulf %85, %86 : vector<16x1xf32>
    %88 = arith.mulf %81, %81 : vector<16x128xf32>
    %cst_27 = arith.constant dense<0.000000e+00> : vector<16xf32>
    %89 = vector.multi_reduction <add>, %88, %cst_27 [1] : vector<16x128xf32> to vector<16xf32>
    %90 = vector.shape_cast %89 : vector<16xf32> to vector<16x1xf32>
    %cst_28 = arith.constant 3.125000e-02 : f32
    %91 = vector.broadcast %cst_28 : f32 to vector<16x1xf32>
    %92 = arith.mulf %90, %91 : vector<16x1xf32>
    %93 = arith.mulf %87, %87 : vector<16x1xf32>
    %94 = arith.subf %92, %93 : vector<16x1xf32>
    %cst_29 = arith.constant 0.000000e+00 : f32
    %95 = vector.broadcast %cst_29 : f32 to vector<16x1xf32>
    %96 = arith.maximumf %94, %95 : vector<16x1xf32>
    %97 = vector.broadcast %87 : vector<16x1xf32> to vector<16x128xf32>
    %98 = arith.subf %81, %97 : vector<16x128xf32>
    %cst_30 = arith.constant 9.99999974E-6 : f32
    %99 = vector.broadcast %cst_30 : f32 to vector<16x1xf32>
    %100 = arith.addf %96, %99 : vector<16x1xf32>
    %101 = math.rsqrt %100 : vector<16x1xf32>
    %102 = vector.broadcast %101 : vector<16x1xf32> to vector<16x128xf32>
    %103 = arith.mulf %98, %102 : vector<16x128xf32>
    %104 = vector.broadcast %82 : vector<1x128xf32> to vector<16x128xf32>
    %105 = arith.mulf %103, %104 : vector<16x128xf32>
    %106 = vector.broadcast %83 : vector<1x128xf32> to vector<16x128xf32>
    %107 = arith.addf %105, %106 : vector<16x128xf32>
    %cst_31 = arith.constant 0.000000e+00 : f32
    %108 = vector.broadcast %cst_31 : f32 to vector<16x128xf32>
    %109 = arith.maximumf %107, %108 : vector<16x128xf32>
    %110 = arith.truncf %109 : vector<16x128xf32> to vector<16x128xbf16>
    %c0_32 = arith.constant 0 : index
    %c0_33 = arith.constant 0 : index
    %111 = vector.load %arg5[%c0_32, %c0_33] : memref<128x128xbf16, #tpu.memory_space<vmem>>, vector<128x128xbf16>
    %cst_34 = arith.constant dense<0.000000e+00> : vector<16x128xf32>
    %112 = tpu.matmul %110, %111, %cst_34 {dimension_numbers = #tpu.dot_dimension_numbers<[1], [0], [0], [1], [0, 0, 1, 1], [], []>} : vector<16x128xbf16>, vector<128x128xbf16>, vector<16x128xf32> -> vector<16x128xf32>
    %113 = vector.extract_strided_slice %0 {offsets = [10, 0], sizes = [1, 128], strides = [1, 1]} : vector<16x128xf32> to vector<1x128xf32>
    %114 = vector.broadcast %113 : vector<1x128xf32> to vector<16x128xf32>
    %115 = arith.addf %112, %114 : vector<16x128xf32>
    %116 = vector.extract_strided_slice %0 {offsets = [11, 0], sizes = [1, 128], strides = [1, 1]} : vector<16x128xf32> to vector<1x128xf32>
    %117 = vector.extract_strided_slice %0 {offsets = [12, 0], sizes = [1, 128], strides = [1, 1]} : vector<16x128xf32> to vector<1x128xf32>
    %cst_35 = arith.constant dense<0.000000e+00> : vector<16xf32>
    %118 = vector.multi_reduction <add>, %115, %cst_35 [1] : vector<16x128xf32> to vector<16xf32>
    %119 = vector.shape_cast %118 : vector<16xf32> to vector<16x1xf32>
    %cst_36 = arith.constant 3.125000e-02 : f32
    %120 = vector.broadcast %cst_36 : f32 to vector<16x1xf32>
    %121 = arith.mulf %119, %120 : vector<16x1xf32>
    %122 = arith.mulf %115, %115 : vector<16x128xf32>
    %cst_37 = arith.constant dense<0.000000e+00> : vector<16xf32>
    %123 = vector.multi_reduction <add>, %122, %cst_37 [1] : vector<16x128xf32> to vector<16xf32>
    %124 = vector.shape_cast %123 : vector<16xf32> to vector<16x1xf32>
    %cst_38 = arith.constant 3.125000e-02 : f32
    %125 = vector.broadcast %cst_38 : f32 to vector<16x1xf32>
    %126 = arith.mulf %124, %125 : vector<16x1xf32>
    %127 = arith.mulf %121, %121 : vector<16x1xf32>
    %128 = arith.subf %126, %127 : vector<16x1xf32>
    %cst_39 = arith.constant 0.000000e+00 : f32
    %129 = vector.broadcast %cst_39 : f32 to vector<16x1xf32>
    %130 = arith.maximumf %128, %129 : vector<16x1xf32>
    %131 = vector.broadcast %121 : vector<16x1xf32> to vector<16x128xf32>
    %132 = arith.subf %115, %131 : vector<16x128xf32>
    %cst_40 = arith.constant 9.99999974E-6 : f32
    %133 = vector.broadcast %cst_40 : f32 to vector<16x1xf32>
    %134 = arith.addf %130, %133 : vector<16x1xf32>
    %135 = math.rsqrt %134 : vector<16x1xf32>
    %136 = vector.broadcast %135 : vector<16x1xf32> to vector<16x128xf32>
    %137 = arith.mulf %132, %136 : vector<16x128xf32>
    %138 = vector.broadcast %116 : vector<1x128xf32> to vector<16x128xf32>
    %139 = arith.mulf %137, %138 : vector<16x128xf32>
    %140 = vector.broadcast %117 : vector<1x128xf32> to vector<16x128xf32>
    %141 = arith.addf %139, %140 : vector<16x128xf32>
    %cst_41 = arith.constant 0.000000e+00 : f32
    %142 = vector.broadcast %cst_41 : f32 to vector<16x128xf32>
    %143 = arith.maximumf %141, %142 : vector<16x128xf32>
    %144 = arith.truncf %143 : vector<16x128xf32> to vector<16x128xbf16>
    %c0_42 = arith.constant 0 : index
    %c0_43 = arith.constant 0 : index
    %145 = vector.load %arg6[%c0_42, %c0_43] : memref<128x128xbf16, #tpu.memory_space<vmem>>, vector<128x128xbf16>
    %cst_44 = arith.constant dense<0.000000e+00> : vector<16x128xf32>
    %146 = tpu.matmul %144, %145, %cst_44 {dimension_numbers = #tpu.dot_dimension_numbers<[1], [0], [0], [1], [0, 0, 1, 1], [], []>} : vector<16x128xbf16>, vector<128x128xbf16>, vector<16x128xf32> -> vector<16x128xf32>
    %147 = vector.extract_strided_slice %0 {offsets = [13, 0], sizes = [1, 128], strides = [1, 1]} : vector<16x128xf32> to vector<1x128xf32>
    %148 = vector.broadcast %147 : vector<1x128xf32> to vector<16x128xf32>
    %149 = arith.addf %146, %148 : vector<16x128xf32>
    %c0_45 = arith.constant 0 : index
    %c0_46 = arith.constant 0 : index
    %150 = vector.load %arg8[%c0_45, %c0_46] : memref<16x128xf32, #tpu.memory_space<vmem>>, vector<16x128xf32>
    tpu.vector_store %arg8[%c0_45, %c0_46], %149 {strides = array<i32>} : memref<16x128xf32, #tpu.memory_space<vmem>>, vector<16x128xf32>,
    return
  }
  func.func @transform_0(%arg0: i32) -> (i32, i32) {
    %c0_i32 = arith.constant 0 : i32
    %c0_i32_0 = arith.constant 0 : i32
    return %arg0, %c0_i32 : i32, i32
  }
  func.func @transform_1(%arg0: i32) -> (i32, i32) {
    %c0_i32 = arith.constant 0 : i32
    %c0_i32_0 = arith.constant 0 : i32
    %c0_i32_1 = arith.constant 0 : i32
    return %c0_i32, %c0_i32_0 : i32, i32
  }
  func.func @transform_2(%arg0: i32) -> (i32, i32) {
    %c0_i32 = arith.constant 0 : i32
    %c0_i32_0 = arith.constant 0 : i32
    %c0_i32_1 = arith.constant 0 : i32
    return %c0_i32, %c0_i32_0 : i32, i32
  }
  func.func @transform_3(%arg0: i32) -> (i32, i32) {
    %c0_i32 = arith.constant 0 : i32
    %c0_i32_0 = arith.constant 0 : i32
    %c0_i32_1 = arith.constant 0 : i32
    return %c0_i32, %c0_i32_0 : i32, i32
  }
  func.func @transform_4(%arg0: i32) -> (i32, i32) {
    %c0_i32 = arith.constant 0 : i32
    %c0_i32_0 = arith.constant 0 : i32
    %c0_i32_1 = arith.constant 0 : i32
    return %c0_i32, %c0_i32_0 : i32, i32
  }
  func.func @transform_5(%arg0: i32) -> (i32, i32) {
    %c0_i32 = arith.constant 0 : i32
    %c0_i32_0 = arith.constant 0 : i32
    %c0_i32_1 = arith.constant 0 : i32
    return %c0_i32, %c0_i32_0 : i32, i32
  }
  func.func @transform_6(%arg0: i32) -> (i32, i32) {
    %c0_i32 = arith.constant 0 : i32
    %c0_i32_0 = arith.constant 0 : i32
    %c0_i32_1 = arith.constant 0 : i32
    return %c0_i32, %c0_i32_0 : i32, i32
  }
  func.func @transform_7(%arg0: i32) -> (i32, i32) {
    %c0_i32 = arith.constant 0 : i32
    %c0_i32_0 = arith.constant 0 : i32
    return %arg0, %c0_i32 : i32, i32
  }
}

module attributes {stable_mosaic.version = 11 : i64} {
  func.func @dqn_kernel(%arg0: i32, %arg1: memref<16x16xf32, #tpu.memory_space<vmem>>, %arg2: memref<16x128xbf16, #tpu.memory_space<vmem>>, %arg3: memref<128x256xbf16, #tpu.memory_space<vmem>>, %arg4: memref<128x128xbf16, #tpu.memory_space<vmem>>, %arg5: memref<128x128xbf16, #tpu.memory_space<vmem>>, %arg6: memref<128x128xbf16, #tpu.memory_space<vmem>>, %arg7: memref<16x128xf32, #tpu.memory_space<vmem>>, %arg8: memref<16x128xf32, #tpu.memory_space<vmem>>) attributes {dimension_semantics = [#tpu.dimension_semantics<parallel>], iteration_bounds = array<i64: 1>, scalar_prefetch = 0 : i64, scratch_operands = 0 : i64, tpu.core_type = #tpu.core_type<tc>, window_params = [{transform_indices = @transform_0, window_bounds = array<i64: 16, 16>}, {pipeline_mode = #tpu.pipeline_mode<synchronous>, transform_indices = @transform_1, window_bounds = array<i64: 16, 128>}, {pipeline_mode = #tpu.pipeline_mode<synchronous>, transform_indices = @transform_2, window_bounds = array<i64: 128, 256>}, {pipeline_mode = #tpu.pipeline_mode<synchronous>, transform_indices = @transform_3, window_bounds = array<i64: 128, 128>}, {pipeline_mode = #tpu.pipeline_mode<synchronous>, transform_indices = @transform_4, window_bounds = array<i64: 128, 128>}, {pipeline_mode = #tpu.pipeline_mode<synchronous>, transform_indices = @transform_5, window_bounds = array<i64: 128, 128>}, {pipeline_mode = #tpu.pipeline_mode<synchronous>, transform_indices = @transform_6, window_bounds = array<i64: 16, 128>}, {transform_indices = @transform_7, window_bounds = array<i64: 16, 128>}]} {
    %c0 = arith.constant 0 : index
    %c0_0 = arith.constant 0 : index
    %0 = vector.load %arg7[%c0, %c0_0] : memref<16x128xf32, #tpu.memory_space<vmem>>, vector<16x128xf32>
    %c0_1 = arith.constant 0 : index
    %c0_2 = arith.constant 0 : index
    %1 = vector.load %arg1[%c0_1, %c0_2] : memref<16x16xf32, #tpu.memory_space<vmem>>, vector<16x16xf32>
    %2 = arith.truncf %1 : vector<16x16xf32> to vector<16x16xbf16>
    %c0_3 = arith.constant 0 : index
    %c0_4 = arith.constant 0 : index
    %3 = vector.load %arg2[%c0_3, %c0_4] : memref<16x128xbf16, #tpu.memory_space<vmem>>, vector<16x128xbf16>
    %cst = arith.constant dense<0.000000e+00> : vector<16x128xf32>
    %4 = tpu.matmul %2, %3, %cst {dimension_numbers = #tpu.dot_dimension_numbers<[1], [0], [0], [1], [0, 0, 1, 1], [], []>} : vector<16x16xbf16>, vector<16x128xbf16>, vector<16x128xf32> -> vector<16x128xf32>
    %5 = vector.extract_strided_slice %0 {offsets = [0, 0], sizes = [1, 128], strides = [1, 1]} : vector<16x128xf32> to vector<1x128xf32>
    %6 = vector.broadcast %5 : vector<1x128xf32> to vector<16x128xf32>
    %7 = arith.addf %4, %6 : vector<16x128xf32>
    %8 = vector.extract_strided_slice %0 {offsets = [1, 0], sizes = [1, 128], strides = [1, 1]} : vector<16x128xf32> to vector<1x128xf32>
    %9 = vector.extract_strided_slice %0 {offsets = [2, 0], sizes = [1, 128], strides = [1, 1]} : vector<16x128xf32> to vector<1x128xf32>
    %cst_5 = arith.constant dense<0.000000e+00> : vector<16xf32>
    %10 = vector.multi_reduction <add>, %7, %cst_5 [1] : vector<16x128xf32> to vector<16xf32>
    %11 = vector.shape_cast %10 : vector<16xf32> to vector<16x1xf32>
    %cst_6 = arith.constant 3.125000e-02 : f32
    %12 = vector.broadcast %cst_6 : f32 to vector<16x1xf32>
    %13 = arith.mulf %11, %12 : vector<16x1xf32>
    %14 = arith.mulf %7, %7 : vector<16x128xf32>
    %cst_7 = arith.constant dense<0.000000e+00> : vector<16xf32>
    %15 = vector.multi_reduction <add>, %14, %cst_7 [1] : vector<16x128xf32> to vector<16xf32>
    %16 = vector.shape_cast %15 : vector<16xf32> to vector<16x1xf32>
    %cst_8 = arith.constant 3.125000e-02 : f32
    %17 = vector.broadcast %cst_8 : f32 to vector<16x1xf32>
    %18 = arith.mulf %16, %17 : vector<16x1xf32>
    %19 = arith.mulf %13, %13 : vector<16x1xf32>
    %20 = arith.subf %18, %19 : vector<16x1xf32>
    %cst_9 = arith.constant 0.000000e+00 : f32
    %21 = vector.broadcast %cst_9 : f32 to vector<16x1xf32>
    %22 = arith.maximumf %20, %21 : vector<16x1xf32>
    %23 = vector.broadcast %13 : vector<16x1xf32> to vector<16x128xf32>
    %24 = arith.subf %7, %23 : vector<16x128xf32>
    %cst_10 = arith.constant 9.99999974E-6 : f32
    %25 = vector.broadcast %cst_10 : f32 to vector<16x1xf32>
    %26 = arith.addf %22, %25 : vector<16x1xf32>
    %27 = math.rsqrt %26 : vector<16x1xf32>
    %28 = vector.broadcast %27 : vector<16x1xf32> to vector<16x128xf32>
    %29 = arith.mulf %24, %28 : vector<16x128xf32>
    %30 = vector.broadcast %8 : vector<1x128xf32> to vector<16x128xf32>
    %31 = arith.mulf %29, %30 : vector<16x128xf32>
    %32 = vector.broadcast %9 : vector<1x128xf32> to vector<16x128xf32>
    %33 = arith.addf %31, %32 : vector<16x128xf32>
    %cst_11 = arith.constant 0.000000e+00 : f32
    %34 = vector.broadcast %cst_11 : f32 to vector<16x128xf32>
    %35 = arith.maximumf %33, %34 : vector<16x128xf32>
    %36 = arith.truncf %35 : vector<16x128xf32> to vector<16x128xbf16>
    %c0_12 = arith.constant 0 : index
    %c0_13 = arith.constant 0 : index
    %37 = vector.load %arg3[%c0_12, %c0_13] : memref<128x256xbf16, #tpu.memory_space<vmem>>, vector<128x256xbf16>
    %cst_14 = arith.constant dense<0.000000e+00> : vector<16x256xf32>
    %38 = tpu.matmul %36, %37, %cst_14 {dimension_numbers = #tpu.dot_dimension_numbers<[1], [0], [0], [1], [0, 0, 1, 1], [], []>} : vector<16x128xbf16>, vector<128x256xbf16>, vector<16x256xf32> -> vector<16x256xf32>
    %39 = vector.extract_strided_slice %38 {offsets = [0, 0], sizes = [16, 128], strides = [1, 1]} : vector<16x256xf32> to vector<16x128xf32>
    %40 = vector.extract_strided_slice %0 {offsets = [3, 0], sizes = [1, 128], strides = [1, 1]} : vector<16x128xf32> to vector<1x128xf32>
    %41 = vector.broadcast %40 : vector<1x128xf32> to vector<16x128xf32>
    %42 = arith.addf %39, %41 : vector<16x128xf32>
    %43 = vector.extract_strided_slice %38 {offsets = [0, 128], sizes = [16, 128], strides = [1, 1]} : vector<16x256xf32> to vector<16x128xf32>
    %44 = vector.extract_strided_slice %0 {offsets = [6, 0], sizes = [1, 128], strides = [1, 1]} : vector<16x128xf32> to vector<1x128xf32>
    %45 = vector.broadcast %44 : vector<1x128xf32> to vector<16x128xf32>
    %46 = arith.addf %43, %45 : vector<16x128xf32>
    %47 = vector.extract_strided_slice %0 {offsets = [4, 0], sizes = [1, 128], strides = [1, 1]} : vector<16x128xf32> to vector<1x128xf32>
    %48 = vector.extract_strided_slice %0 {offsets = [5, 0], sizes = [1, 128], strides = [1, 1]} : vector<16x128xf32> to vector<1x128xf32>
    %cst_15 = arith.constant dense<0.000000e+00> : vector<16xf32>
    %49 = vector.multi_reduction <add>, %42, %cst_15 [1] : vector<16x128xf32> to vector<16xf32>
    %50 = vector.shape_cast %49 : vector<16xf32> to vector<16x1xf32>
    %cst_16 = arith.constant 3.125000e-02 : f32
    %51 = vector.broadcast %cst_16 : f32 to vector<16x1xf32>
    %52 = arith.mulf %50, %51 : vector<16x1xf32>
    %53 = arith.mulf %42, %42 : vector<16x128xf32>
    %cst_17 = arith.constant dense<0.000000e+00> : vector<16xf32>
    %54 = vector.multi_reduction <add>, %53, %cst_17 [1] : vector<16x128xf32> to vector<16xf32>
    %55 = vector.shape_cast %54 : vector<16xf32> to vector<16x1xf32>
    %cst_18 = arith.constant 3.125000e-02 : f32
    %56 = vector.broadcast %cst_18 : f32 to vector<16x1xf32>
    %57 = arith.mulf %55, %56 : vector<16x1xf32>
    %58 = arith.mulf %52, %52 : vector<16x1xf32>
    %59 = arith.subf %57, %58 : vector<16x1xf32>
    %cst_19 = arith.constant 0.000000e+00 : f32
    %60 = vector.broadcast %cst_19 : f32 to vector<16x1xf32>
    %61 = arith.maximumf %59, %60 : vector<16x1xf32>
    %62 = vector.broadcast %52 : vector<16x1xf32> to vector<16x128xf32>
    %63 = arith.subf %42, %62 : vector<16x128xf32>
    %cst_20 = arith.constant 9.99999974E-6 : f32
    %64 = vector.broadcast %cst_20 : f32 to vector<16x1xf32>
    %65 = arith.addf %61, %64 : vector<16x1xf32>
    %66 = math.rsqrt %65 : vector<16x1xf32>
    %67 = vector.broadcast %66 : vector<16x1xf32> to vector<16x128xf32>
    %68 = arith.mulf %63, %67 : vector<16x128xf32>
    %69 = vector.broadcast %47 : vector<1x128xf32> to vector<16x128xf32>
    %70 = arith.mulf %68, %69 : vector<16x128xf32>
    %71 = vector.broadcast %48 : vector<1x128xf32> to vector<16x128xf32>
    %72 = arith.addf %70, %71 : vector<16x128xf32>
    %cst_21 = arith.constant 0.000000e+00 : f32
    %73 = vector.broadcast %cst_21 : f32 to vector<16x128xf32>
    %74 = arith.maximumf %72, %73 : vector<16x128xf32>
    %75 = arith.addf %74, %46 : vector<16x128xf32>
    %76 = arith.truncf %75 : vector<16x128xf32> to vector<16x128xbf16>
    %c0_22 = arith.constant 0 : index
    %c0_23 = arith.constant 0 : index
    %77 = vector.load %arg4[%c0_22, %c0_23] : memref<128x128xbf16, #tpu.memory_space<vmem>>, vector<128x128xbf16>
    %cst_24 = arith.constant dense<0.000000e+00> : vector<16x128xf32>
    %78 = tpu.matmul %76, %77, %cst_24 {dimension_numbers = #tpu.dot_dimension_numbers<[1], [0], [0], [1], [0, 0, 1, 1], [], []>} : vector<16x128xbf16>, vector<128x128xbf16>, vector<16x128xf32> -> vector<16x128xf32>
    %79 = vector.extract_strided_slice %0 {offsets = [7, 0], sizes = [1, 128], strides = [1, 1]} : vector<16x128xf32> to vector<1x128xf32>
    %80 = vector.broadcast %79 : vector<1x128xf32> to vector<16x128xf32>
    %81 = arith.addf %78, %80 : vector<16x128xf32>
    %82 = vector.extract_strided_slice %0 {offsets = [8, 0], sizes = [1, 128], strides = [1, 1]} : vector<16x128xf32> to vector<1x128xf32>
    %83 = vector.extract_strided_slice %0 {offsets = [9, 0], sizes = [1, 128], strides = [1, 1]} : vector<16x128xf32> to vector<1x128xf32>
    %cst_25 = arith.constant dense<0.000000e+00> : vector<16xf32>
    %84 = vector.multi_reduction <add>, %81, %cst_25 [1] : vector<16x128xf32> to vector<16xf32>
    %85 = vector.shape_cast %84 : vector<16xf32> to vector<16x1xf32>
    %cst_26 = arith.constant 3.125000e-02 : f32
    %86 = vector.broadcast %cst_26 : f32 to vector<16x1xf32>
    %87 = arith.mulf %85, %86 : vector<16x1xf32>
    %88 = arith.mulf %81, %81 : vector<16x128xf32>
    %cst_27 = arith.constant dense<0.000000e+00> : vector<16xf32>
    %89 = vector.multi_reduction <add>, %88, %cst_27 [1] : vector<16x128xf32> to vector<16xf32>
    %90 = vector.shape_cast %89 : vector<16xf32> to vector<16x1xf32>
    %cst_28 = arith.constant 3.125000e-02 : f32
    %91 = vector.broadcast %cst_28 : f32 to vector<16x1xf32>
    %92 = arith.mulf %90, %91 : vector<16x1xf32>
    %93 = arith.mulf %87, %87 : vector<16x1xf32>
    %94 = arith.subf %92, %93 : vector<16x1xf32>
    %cst_29 = arith.constant 0.000000e+00 : f32
    %95 = vector.broadcast %cst_29 : f32 to vector<16x1xf32>
    %96 = arith.maximumf %94, %95 : vector<16x1xf32>
    %97 = vector.broadcast %87 : vector<16x1xf32> to vector<16x128xf32>
    %98 = arith.subf %81, %97 : vector<16x128xf32>
    %cst_30 = arith.constant 9.99999974E-6 : f32
    %99 = vector.broadcast %cst_30 : f32 to vector<16x1xf32>
    %100 = arith.addf %96, %99 : vector<16x1xf32>
    %101 = math.rsqrt %100 : vector<16x1xf32>
    %102 = vector.broadcast %101 : vector<16x1xf32> to vector<16x128xf32>
    %103 = arith.mulf %98, %102 : vector<16x128xf32>
    %104 = vector.broadcast %82 : vector<1x128xf32> to vector<16x128xf32>
    %105 = arith.mulf %103, %104 : vector<16x128xf32>
    %106 = vector.broadcast %83 : vector<1x128xf32> to vector<16x128xf32>
    %107 = arith.addf %105, %106 : vector<16x128xf32>
    %cst_31 = arith.constant 0.000000e+00 : f32
    %108 = vector.broadcast %cst_31 : f32 to vector<16x128xf32>
    %109 = arith.maximumf %107, %108 : vector<16x128xf32>
    %110 = arith.truncf %109 : vector<16x128xf32> to vector<16x128xbf16>
    %c0_32 = arith.constant 0 : index
    %c0_33 = arith.constant 0 : index
    %111 = vector.load %arg5[%c0_32, %c0_33] : memref<128x128xbf16, #tpu.memory_space<vmem>>, vector<128x128xbf16>
    %cst_34 = arith.constant dense<0.000000e+00> : vector<16x128xf32>
    %112 = tpu.matmul %110, %111, %cst_34 {dimension_numbers = #tpu.dot_dimension_numbers<[1], [0], [0], [1], [0, 0, 1, 1], [], []>} : vector<16x128xbf16>, vector<128x128xbf16>, vector<16x128xf32> -> vector<16x128xf32>
    %113 = vector.extract_strided_slice %0 {offsets = [10, 0], sizes = [1, 128], strides = [1, 1]} : vector<16x128xf32> to vector<1x128xf32>
    %114 = vector.broadcast %113 : vector<1x128xf32> to vector<16x128xf32>
    %115 = arith.addf %112, %114 : vector<16x128xf32>
    %116 = vector.extract_strided_slice %0 {offsets = [11, 0], sizes = [1, 128], strides = [1, 1]} : vector<16x128xf32> to vector<1x128xf32>
    %117 = vector.extract_strided_slice %0 {offsets = [12, 0], sizes = [1, 128], strides = [1, 1]} : vector<16x128xf32> to vector<1x128xf32>
    %cst_35 = arith.constant dense<0.000000e+00> : vector<16xf32>
    %118 = vector.multi_reduction <add>, %115, %cst_35 [1] : vector<16x128xf32> to vector<16xf32>
    %119 = vector.shape_cast %118 : vector<16xf32> to vector<16x1xf32>
    %cst_36 = arith.constant 3.125000e-02 : f32
    %120 = vector.broadcast %cst_36 : f32 to vector<16x1xf32>
    %121 = arith.mulf %119, %120 : vector<16x1xf32>
    %122 = arith.mulf %115, %115 : vector<16x128xf32>
    %cst_37 = arith.constant dense<0.000000e+00> : vector<16xf32>
    %123 = vector.multi_reduction <add>, %122, %cst_37 [1] : vector<16x128xf32> to vector<16xf32>
    %124 = vector.shape_cast %123 : vector<16xf32> to vector<16x1xf32>
    %cst_38 = arith.constant 3.125000e-02 : f32
    %125 = vector.broadcast %cst_38 : f32 to vector<16x1xf32>
    %126 = arith.mulf %124, %125 : vector<16x1xf32>
    %127 = arith.mulf %121, %121 : vector<16x1xf32>
    %128 = arith.subf %126, %127 : vector<16x1xf32>
    %cst_39 = arith.constant 0.000000e+00 : f32
    %129 = vector.broadcast %cst_39 : f32 to vector<16x1xf32>
    %130 = arith.maximumf %128, %129 : vector<16x1xf32>
    %131 = vector.broadcast %121 : vector<16x1xf32> to vector<16x128xf32>
    %132 = arith.subf %115, %131 : vector<16x128xf32>
    %cst_40 = arith.constant 9.99999974E-6 : f32
    %133 = vector.broadcast %cst_40 : f32 to vector<16x1xf32>
    %134 = arith.addf %130, %133 : vector<16x1xf32>
    %135 = math.rsqrt %134 : vector<16x1xf32>
    %136 = vector.broadcast %135 : vector<16x1xf32> to vector<16x128xf32>
    %137 = arith.mulf %132, %136 : vector<16x128xf32>
    %138 = vector.broadcast %116 : vector<1x128xf32> to vector<16x128xf32>
    %139 = arith.mulf %137, %138 : vector<16x128xf32>
    %140 = vector.broadcast %117 : vector<1x128xf32> to vector<16x128xf32>
    %141 = arith.addf %139, %140 : vector<16x128xf32>
    %cst_41 = arith.constant 0.000000e+00 : f32
    %142 = vector.broadcast %cst_41 : f32 to vector<16x128xf32>
    %143 = arith.maximumf %141, %142 : vector<16x128xf32>
    %144 = arith.truncf %143 : vector<16x128xf32> to vector<16x128xbf16>
    %c0_42 = arith.constant 0 : index
    %c0_43 = arith.constant 0 : index
    %145 = vector.load %arg6[%c0_42, %c0_43] : memref<128x128xbf16, #tpu.memory_space<vmem>>, vector<128x128xbf16>
    %cst_44 = arith.constant dense<0.000000e+00> : vector<16x128xf32>
    %146 = tpu.matmul %144, %145, %cst_44 {dimension_numbers = #tpu.dot_dimension_numbers<[1], [0], [0], [1], [0, 0, 1, 1], [], []>} : vector<16x128xbf16>, vector<128x128xbf16>, vector<16x128xf32> -> vector<16x128xf32>
    %147 = vector.extract_strided_slice %0 {offsets = [13, 0], sizes = [1, 128], strides = [1, 1]} : vector<16x128xf32> to vector<1x128xf32>
    %148 = vector.broadcast %147 : vector<1x128xf32> to vector<16x128xf32>
    %149 = arith.addf %146, %148 : vector<16x128xf32>
    %c0_45 = arith.constant 0 : index
    %c0_46 = arith.constant 0 : index
    %150 = vector.load %arg8[%c0_45, %c0_46] : memref<16x128xf32, #tpu.memory_space<vmem>>, vector<16x128xf32>
    tpu.vector_store %arg8[%c0_45, %c0_46], %149 {strides = array<i32>} : memref<16x128xf32, #tpu.memory_space<vmem>>, vector<16x128xf32>,
    return
  }
  func.func @transform_0(%arg0: i32) -> (i32, i32) {
    %c0_i32 = arith.constant 0 : i32
    %c0_i32_0 = arith.constant 0 : i32
    return %arg0, %c0_i32 : i32, i32
  }
  func.func @transform_1(%arg0: i32) -> (i32, i32) {
    %c0_i32 = arith.constant 0 : i32
    %c0_i32_0 = arith.constant 0 : i32
    %c0_i32_1 = arith.constant 0 : i32
    return %c0_i32, %c0_i32_0 : i32, i32
  }
  func.func @transform_2(%arg0: i32) -> (i32, i32) {
    %c0_i32 = arith.constant 0 : i32
    %c0_i32_0 = arith.constant 0 : i32
    %c0_i32_1 = arith.constant 0 : i32
    return %c0_i32, %c0_i32_0 : i32, i32
  }
  func.func @transform_3(%arg0: i32) -> (i32, i32) {
    %c0_i32 = arith.constant 0 : i32
    %c0_i32_0 = arith.constant 0 : i32
    %c0_i32_1 = arith.constant 0 : i32
    return %c0_i32, %c0_i32_0 : i32, i32
  }
  func.func @transform_4(%arg0: i32) -> (i32, i32) {
    %c0_i32 = arith.constant 0 : i32
    %c0_i32_0 = arith.constant 0 : i32
    %c0_i32_1 = arith.constant 0 : i32
    return %c0_i32, %c0_i32_0 : i32, i32
  }
  func.func @transform_5(%arg0: i32) -> (i32, i32) {
    %c0_i32 = arith.constant 0 : i32
    %c0_i32_0 = arith.constant 0 : i32
    %c0_i32_1 = arith.constant 0 : i32
    return %c0_i32, %c0_i32_0 : i32, i32
  }
  func.func @transform_6(%arg0: i32) -> (i32, i32) {
    %c0_i32 = arith.constant 0 : i32
    %c0_i32_0 = arith.constant 0 : i32
    %c0_i32_1 = arith.constant 0 : i32
    return %c0_i32, %c0_i32_0 : i32, i32
  }
  func.func @transform_7(%arg0: i32) -> (i32, i32) {
    %c0_i32 = arith.constant 0 : i32
    %c0_i32_0 = arith.constant 0 : i32
    return %arg0, %c0_i32 : i32, i32
  }
}

</mosaic_0001>

<llo_original>
// kernel: tpu_custom_call.1
$region0: #{tpu_custom_call.1}
  #allocation0 [shape = 'u32[]', space=smem, size = 0x4, offset = 0x4, fixed_abs, tag = 'smem constant byte address 0x4 - core index']
  #allocation1 [shape = 'u32[144,128]{1,0:T(1,128)}', space=vmem, size = 0x12000, scoped, tag = 'internal scratch']
  %s0 = inlined_call_operand.hbm [shape: f32[16,16], index: 0, kind: input, shape index: {}]
  %s1 = inlined_call_operand.hbm [shape: bf16[16,128], index: 1, kind: input, shape index: {}]
  %s2 = inlined_call_operand.hbm [shape: bf16[128,256], index: 2, kind: input, shape index: {}]
  %s3 = inlined_call_operand.hbm [shape: bf16[128,128], index: 3, kind: input, shape index: {}]
  %s4 = inlined_call_operand.hbm [shape: bf16[128,128], index: 4, kind: input, shape index: {}]
  %s5 = inlined_call_operand.hbm [shape: bf16[128,128], index: 5, kind: input, shape index: {}]
  %s6 = inlined_call_operand.vmem [shape: f32[16,128], index: 6, kind: input, shape index: {}]
  %s7 = inlined_call_operand.hbm [shape: f32[16,128], index: 7, kind: output, shape index: {}]
  %s8 = sld [smem:[#allocation0]]
  $region62: #{tpu_custom_call.1} parent=0
    _
  %s10 = ssub.s32 1, %s8
  %s11 = scalar_select 0, %s10, %s8
  $region1: #{tpu_custom_call.1} parent=0
    #allocation2 [shape = 'u8[8192]{0}', space=vmem, size = 0x2000, scoped, tag = 'input window, operand 0, single buffered']
    #allocation3 [shape = 's32[1]{0}', space=sflag, size = 0x4, scoped, tag = 'scoped memory for tpu_custom_call.1']
    #allocation4 [shape = 's32[1]{0}', space=sflag, size = 0x4, scoped, tag = 'scoped memory for tpu_custom_call.1']
    #allocation5 [shape = 'u8[4096]{0}', space=vmem, size = 0x1000, scoped, tag = 'input window, operand 1, single buffered']
    #allocation6 [shape = 's32[1]{0}', space=sflag, size = 0x4, scoped, tag = 'scoped memory for tpu_custom_call.1']
    #allocation7 [shape = 'u8[65536]{0}', space=vmem, size = 0x10000, scoped, tag = 'input window, operand 2, single buffered']
    #allocation8 [shape = 'u8[32768]{0}', space=vmem, size = 0x8000, scoped, tag = 'input window, operand 3, single buffered']
    #allocation9 [shape = 's32[1]{0}', space=sflag, size = 0x4, scoped, tag = 'scoped memory for tpu_custom_call.1']
    #allocation10 [shape = 'u8[32768]{0}', space=vmem, size = 0x8000, scoped, tag = 'input window, operand 4, single buffered']
    #allocation11 [shape = 'u8[32768]{0}', space=vmem, size = 0x8000, scoped, tag = 'input window, operand 5, single buffered']
    #allocation12 [shape = 's32[1]{0}', space=sflag, size = 0x4, scoped, tag = 'scoped memory for tpu_custom_call.1']
    #allocation13 [shape = 'u8[8192]{0}', space=vmem, size = 0x2000, scoped, tag = 'output window, operand 0, single buffered']
    %12 = vsyncpa [#allocation3], 0
    %13 = vsyncpa [#allocation6], 0
    %14 = vsyncpa [#allocation9], 0
    %15 = vsyncpa [#allocation12], 0
    %16 = vsyncpa [#allocation4], 0
    // Predicated region
    $region2: #{tpu_custom_call.1} parent=1 // pred_check
      _
    $region3: #{tpu_custom_call.1} parent=1 // pred_check_branch
      %18 = sbr.rel (0) target = $region5
    $region4: #{tpu_custom_call.1} parent=1 // pred_region
      %s20 = ssub.s32 256, 256
      %21 = vsyncadd [#allocation3], %s20
      %s22 = sshll.u32 [#allocation2], 4
      %s23 = int_to_ptr.vmem [resolvable:$true] %s22
      %28 = dma.hbm_to_vmem [thread:$0]  %s0, 256, %s23, [#allocation3], 128, 128, 8
    $region5: #{tpu_custom_call.1} parent=1 // pred_fallthru
      _
    // Predicated region
    $region6: #{tpu_custom_call.1} parent=1 // pred_check
      _
    $region7: #{tpu_custom_call.1} parent=1 // pred_check_branch
      %30 = sbr.rel (0) target = $region9
    $region8: #{tpu_custom_call.1} parent=1 // pred_region
      %s32 = ssub.s32 128, 128
      %33 = vsyncadd [#allocation6], %s32
      %s34 = sshll.u32 [#allocation5], 4
      %s35 = int_to_ptr.vmem [resolvable:$true] %s34
      %40 = dma.hbm_to_vmem [thread:$0]  %s1, 128, %s35, [#allocation6], 64, 64, 4
    $region9: #{tpu_custom_call.1} parent=1 // pred_fallthru
      _
    // Predicated region
    $region10: #{tpu_custom_call.1} parent=1 // pred_check
      _
    $region11: #{tpu_custom_call.1} parent=1 // pred_check_branch
      %42 = sbr.rel (0) target = $region13
    $region12: #{tpu_custom_call.1} parent=1 // pred_region
      %s44 = ssub.s32 2048, 2048
      %45 = vsyncadd [#allocation6], %s44
      %s46 = sshll.u32 [#allocation7], 4
      %s47 = int_to_ptr.vmem [resolvable:$true] %s46
      %52 = dma.hbm_to_vmem [thread:$0]  %s2, 2048, %s47, [#allocation6], 128, 128, 8
    $region13: #{tpu_custom_call.1} parent=1 // pred_fallthru
      _
    // Predicated region
    $region14: #{tpu_custom_call.1} parent=1 // pred_check
      _
    $region15: #{tpu_custom_call.1} parent=1 // pred_check_branch
      %54 = sbr.rel (0) target = $region17
    $region16: #{tpu_custom_call.1} parent=1 // pred_region
      %s56 = ssub.s32 1024, 1024
      %57 = vsyncadd [#allocation9], %s56
      %s58 = sshll.u32 [#allocation8], 4
      %s59 = int_to_ptr.vmem [resolvable:$true] %s58
      %64 = dma.hbm_to_vmem [thread:$0]  %s3, 1024, %s59, [#allocation9], 64, 64, 4
    $region17: #{tpu_custom_call.1} parent=1 // pred_fallthru
      _
    // Predicated region
    $region18: #{tpu_custom_call.1} parent=1 // pred_check
      _
    $region19: #{tpu_custom_call.1} parent=1 // pred_check_branch
      %66 = sbr.rel (0) target = $region21
    $region20: #{tpu_custom_call.1} parent=1 // pred_region
      %s68 = ssub.s32 1024, 1024
      %69 = vsyncadd [#allocation9], %s68
      %s70 = sshll.u32 [#allocation10], 4
      %s71 = int_to_ptr.vmem [resolvable:$true] %s70
      %76 = dma.hbm_to_vmem [thread:$0]  %s4, 1024, %s71, [#allocation9], 64, 64, 4
    $region21: #{tpu_custom_call.1} parent=1 // pred_fallthru
      _
    // Predicated region
    $region22: #{tpu_custom_call.1} parent=1 // pred_check
      _
    $region23: #{tpu_custom_call.1} parent=1 // pred_check_branch
      %78 = sbr.rel (0) target = $region25
    $region24: #{tpu_custom_call.1} parent=1 // pred_region
      %s80 = ssub.s32 1024, 1024
      %81 = vsyncadd [#allocation12], %s80
      %s82 = sshll.u32 [#allocation11], 4
      %s83 = int_to_ptr.vmem [resolvable:$true] %s82
      %88 = dma.hbm_to_vmem [thread:$0]  %s5, 1024, %s83, [#allocation12], 64, 64, 4
    $region25: #{tpu_custom_call.1} parent=1 // pred_fallthru
      _
    // Predicated region
    $region26: #{tpu_custom_call.1} parent=1 // pred_check
      _
    $region27: #{tpu_custom_call.1} parent=1 // pred_check_branch
      %90 = sbr.rel (0) target = $region29
    $region28: #{tpu_custom_call.1} parent=1 // pred_region
      _
    $region29: #{tpu_custom_call.1} parent=1 // pred_fallthru
      _
    // Predicated region
    $region30: #{tpu_custom_call.1} parent=1 // pred_check
      _
    $region31: #{tpu_custom_call.1} parent=1 // pred_check_branch
      %92 = sbr.rel (0) target = $region33
    $region32: #{tpu_custom_call.1} parent=1 // pred_region
      %93 = dma.done [#allocation3], 256
    $region33: #{tpu_custom_call.1} parent=1 // pred_fallthru
      _
    // Predicated region
    $region34: #{tpu_custom_call.1} parent=1 // pred_check
      _
    $region35: #{tpu_custom_call.1} parent=1 // pred_check_branch
      %95 = sbr.rel (0) target = $region37
    $region36: #{tpu_custom_call.1} parent=1 // pred_region
      %96 = dma.done [#allocation6], 128
    $region37: #{tpu_custom_call.1} parent=1 // pred_fallthru
      _
    // Predicated region
    $region38: #{tpu_custom_call.1} parent=1 // pred_check
      _
    $region39: #{tpu_custom_call.1} parent=1 // pred_check_branch
      %98 = sbr.rel (0) target = $region41
    $region40: #{tpu_custom_call.1} parent=1 // pred_region
      %99 = dma.done [#allocation6], 2048
    $region41: #{tpu_custom_call.1} parent=1 // pred_fallthru
      _
    // Predicated region
    $region42: #{tpu_custom_call.1} parent=1 // pred_check
      _
    $region43: #{tpu_custom_call.1} parent=1 // pred_check_branch
      %101 = sbr.rel (0) target = $region45
    $region44: #{tpu_custom_call.1} parent=1 // pred_region
      %102 = dma.done [#allocation9], 1024
    $region45: #{tpu_custom_call.1} parent=1 // pred_fallthru
      _
    // Predicated region
    $region46: #{tpu_custom_call.1} parent=1 // pred_check
      _
    $region47: #{tpu_custom_call.1} parent=1 // pred_check_branch
      %104 = sbr.rel (0) target = $region49
    $region48: #{tpu_custom_call.1} parent=1 // pred_region
      %105 = dma.done [#allocation9], 1024
    $region49: #{tpu_custom_call.1} parent=1 // pred_fallthru
      _
    // Predicated region
    $region50: #{tpu_custom_call.1} parent=1 // pred_check
      _
    $region51: #{tpu_custom_call.1} parent=1 // pred_check_branch
      %107 = sbr.rel (0) target = $region53
    $region52: #{tpu_custom_call.1} parent=1 // pred_region
      %108 = dma.done [#allocation12], 1024
    $region53: #{tpu_custom_call.1} parent=1 // pred_fallthru
      _
    %v110 = vld [vmem:[%s6] sm:$0xff]
    %v111 = vld [vmem:[%s6 + $0x8] sm:$0xff]
    %v112 = vld [vmem:[#allocation2] sm:$0xff]
    %v113 = vld [vmem:[#allocation2 + $0x8] sm:$0xff]
    %v114 = vpack.c.bf16 %v113, %v112
    %v115 = vld [vmem:[#allocation5] sm:$0xf]
    %v116 = vld [vmem:[#allocation5 + $0x4] sm:$0xf]
    %v117 = vlaneseq
    %v118 = vshrl.u32 %v117, 7
    %v119 = vsub.s32 0, %v118
    %v120 = vrot.slane %v110, %v119
    %v123 = vunpack.c.l.b16 %v115
    %v124 = vunpack.c.l.b16 %v116
    %v125 = vpack.c.b16 %v124, %v123
    %vm127 = vcmask 130048
    %v129 = vsel %vm127, %v114, 0
    %131 = vmatprep.subr.bf16.mxu0 0
    %132 = vmatpush1.bf16.msra.mxu0 %v125
    %133 = vmatprep.subr.bf16.mxu0 0
    %134 = vmatpush1.bf16.msra.mxu0 0
    %135 = vmatprep.subr.bf16.mxu0 0
    %136 = vmatpush1.bf16.msra.mxu0 0
    %137 = vmatprep.subr.bf16.mxu0 0
    %138 = vmatpush1.bf16.msra.mxu0 0
    %139 = vmatprep.subr.bf16.mxu0 0
    %140 = vmatpush1.bf16.msra.mxu0 0
    %141 = vmatprep.subr.bf16.mxu0 0
    %142 = vmatpush1.bf16.msra.mxu0 0
    %143 = vmatprep.subr.bf16.mxu0 0
    %144 = vmatpush1.bf16.msra.mxu0 0
    %145 = vmatprep.subr.bf16.mxu0 0
    %146 = vmatpush1.bf16.msra.mxu0 0
    %147 = vmatprep.subr.bf16.mxu0 0
    %148 = vmatpush1.bf16.msra.mxu0 0
    %149 = vmatprep.subr.bf16.mxu0 0
    %150 = vmatpush1.bf16.msra.mxu0 0
    %151 = vmatprep.subr.bf16.mxu0 0
    %152 = vmatpush1.bf16.msra.mxu0 0
    %153 = vmatprep.subr.bf16.mxu0 0
    %154 = vmatpush1.bf16.msra.mxu0 0
    %155 = vmatprep.subr.bf16.mxu0 0
    %156 = vmatpush1.bf16.msra.mxu0 0
    %157 = vmatprep.subr.bf16.mxu0 0
    %158 = vmatpush1.bf16.msra.mxu0 0
    %159 = vmatprep.subr.bf16.mxu0 0
    %160 = vmatpush1.bf16.msra.mxu0 0
    %161 = vmatprep.subr.bf16.mxu0 0
    %162 = vmatpush1.bf16.msra.mxu0 0
    %163 = vmatprep.mubr.bf16.mxu0 0
    %164 = vmatmul.mubr.bf16.gmra.mrb[0].mxu0 %v129
    %v165 = vpop.f32.mrb[0].mxu0
    %v166 = vadd.f32 %v120, %v165
    %v167 = vpop.f32.mrb[0].mxu0
    %v168 = vpop.f32.mrb[0].mxu0
    %v169 = vadd.f32 %v120, %v168
    %v170 = vpop.f32.mrb[0].mxu0
    %171 = vdwg.mxu0
    %172 = vadd.xlane.f32.xlu0 %v166
    %v173 = vpop.xlane.xlu0 %172
    %174 = vadd.xlane.f32.xlu0 %v169
    %v175 = vpop.xlane.xlu0 %174
    %v176 = vmul.f32 %v173, 0.03125
    %v177 = vmul.f32 %v175, 0.03125
    %v178 = vmul.f32 %v166, %v166
    %v179 = vmul.f32 %v169, %v169
    %180 = vadd.xlane.f32.xlu0 %v178
    %v181 = vpop.xlane.xlu0 %180
    %182 = vadd.xlane.f32.xlu0 %v179
    %v183 = vpop.xlane.xlu0 %182
    %v184 = vmul.f32 %v181, 0.03125
    %v185 = vmul.f32 %v183, 0.03125
    %v186 = vmul.f32 %v176, %v176
    %v187 = vmul.f32 %v177, %v177
    %v188 = vsub.f32 %v184, %v186
    %v189 = vsub.f32 %v185, %v187
    %v190 = vmax.f32 %v188, 0.0
    %v191 = vmax.f32 %v189, 0.0
    %v192 = vsub.f32 %v166, %v176
    %v193 = vsub.f32 %v169, %v177
    %v194 = vadd.f32 %v190, 1e-05
    %v195 = vadd.f32 %v191, 1e-05
    %v196 = vrsqrt.pop %v194
    %v197 = vrsqrt.pop %v195
    %v198 = vmul.f32 %v192, %v196
    %v199 = vmul.f32 %v193, %v197
    %v200 = vlaneseq
    %v201 = vshrl.u32 %v200, 7
    %v202 = vsub.s32 1, %v201
    %v203 = vrot.slane %v110, %v202
    %v204 = vmul.f32 %v198, %v203
    %v205 = vmul.f32 %v199, %v203
    %v206 = vlaneseq
    %v207 = vshrl.u32 %v206, 7
    %v208 = vsub.s32 2, %v207
    %v209 = vrot.slane %v110, %v208
    %v210 = vadd.f32 %v204, %v209
    %v211 = vadd.f32 %v205, %v209
    %v212 = vmax.f32 %v210, 0.0
    %v213 = vmax.f32 %v211, 0.0
    %v214 = vpack.c.bf16 %v213, %v212
    %v215 = vld [vmem:[#allocation7] sm:$0xff]
    %v216 = vld [vmem:[#allocation7 + $0x8] sm:$0xff]
    %v217 = vld [vmem:[#allocation7 + $0x10] sm:$0xff]
    %v218 = vld [vmem:[#allocation7 + $0x18] sm:$0xff]
    %v219 = vld [vmem:[#allocation7 + $0x20] sm:$0xff]
    %v220 = vld [vmem:[#allocation7 + $0x28] sm:$0xff]
    %v221 = vld [vmem:[#allocation7 + $0x30] sm:$0xff]
    %v222 = vld [vmem:[#allocation7 + $0x38] sm:$0xff]
    %v223 = vld [vmem:[#allocation7 + $0x40] sm:$0xff]
    %v224 = vld [vmem:[#allocation7 + $0x48] sm:$0xff]
    %v225 = vld [vmem:[#allocation7 + $0x50] sm:$0xff]
    %v226 = vld [vmem:[#allocation7 + $0x58] sm:$0xff]
    %v227 = vld [vmem:[#allocation7 + $0x60] sm:$0xff]
    %v228 = vld [vmem:[#allocation7 + $0x68] sm:$0xff]
    %v229 = vld [vmem:[#allocation7 + $0x70] sm:$0xff]
    %v230 = vld [vmem:[#allocation7 + $0x78] sm:$0xff]
    %v247 = vunpack.c.l.b16 %v215
    %v248 = vunpack.c.h.b16 %v215
    %v249 = vunpack.c.l.b16 %v216
    %v250 = vunpack.c.h.b16 %v216
    %v251 = vunpack.c.l.b16 %v217
    %v252 = vunpack.c.h.b16 %v217
    %v253 = vunpack.c.l.b16 %v218
    %v254 = vunpack.c.h.b16 %v218
    %v255 = vunpack.c.l.b16 %v219
    %v256 = vunpack.c.h.b16 %v219
    %v257 = vunpack.c.l.b16 %v220
    %v258 = vunpack.c.h.b16 %v220
    %v259 = vunpack.c.l.b16 %v221
    %v260 = vunpack.c.h.b16 %v221
    %v261 = vunpack.c.l.b16 %v222
    %v262 = vunpack.c.h.b16 %v222
    %v263 = vunpack.c.l.b16 %v223
    %v264 = vunpack.c.h.b16 %v223
    %v265 = vunpack.c.l.b16 %v224
    %v266 = vunpack.c.h.b16 %v224
    %v267 = vunpack.c.l.b16 %v225
    %v268 = vunpack.c.h.b16 %v225
    %v269 = vunpack.c.l.b16 %v226
    %v270 = vunpack.c.h.b16 %v226
    %v271 = vunpack.c.l.b16 %v227
    %v272 = vunpack.c.h.b16 %v227
    %v273 = vunpack.c.l.b16 %v228
    %v274 = vunpack.c.h.b16 %v228
    %v275 = vunpack.c.l.b16 %v229
    %v276 = vunpack.c.h.b16 %v229
    %v277 = vunpack.c.l.b16 %v230
    %v278 = vunpack.c.h.b16 %v230
    %v279 = vpack.c.b16 %v249, %v247
    %v280 = vpack.c.b16 %v250, %v248
    %v281 = vpack.c.b16 %v253, %v251
    %v282 = vpack.c.b16 %v254, %v252
    %v283 = vpack.c.b16 %v257, %v255
    %v284 = vpack.c.b16 %v258, %v256
    %v285 = vpack.c.b16 %v261, %v259
    %v286 = vpack.c.b16 %v262, %v260
    %v287 = vpack.c.b16 %v265, %v263
    %v288 = vpack.c.b16 %v266, %v264
    %v289 = vpack.c.b16 %v269, %v267
    %v290 = vpack.c.b16 %v270, %v268
    %v291 = vpack.c.b16 %v273, %v271
    %v292 = vpack.c.b16 %v274, %v272
    %v293 = vpack.c.b16 %v277, %v275
    %v294 = vpack.c.b16 %v278, %v276
    %311 = vmatprep.subr.bf16.mxu0 %v280
    %312 = vmatpush1.bf16.msra.mxu0 %v279
    %313 = vmatprep.subr.bf16.mxu0 %v282
    %314 = vmatpush1.bf16.msra.mxu0 %v281
    %315 = vmatprep.subr.bf16.mxu0 %v284
    %316 = vmatpush1.bf16.msra.mxu0 %v283
    %317 = vmatprep.subr.bf16.mxu0 %v286
    %318 = vmatpush1.bf16.msra.mxu0 %v285
    %319 = vmatprep.subr.bf16.mxu0 %v288
    %320 = vmatpush1.bf16.msra.mxu0 %v287
    %321 = vmatprep.subr.bf16.mxu0 %v290
    %322 = vmatpush1.bf16.msra.mxu0 %v289
    %323 = vmatprep.subr.bf16.mxu0 %v292
    %324 = vmatpush1.bf16.msra.mxu0 %v291
    %325 = vmatprep.subr.bf16.mxu0 %v294
    %326 = vmatpush1.bf16.msra.mxu0 %v293
    %327 = vmatprep.subr.bf16.mxu0 0
    %328 = vmatpush1.bf16.msra.mxu0 0
    %329 = vmatprep.subr.bf16.mxu0 0
    %330 = vmatpush1.bf16.msra.mxu0 0
    %331 = vmatprep.subr.bf16.mxu0 0
    %332 = vmatpush1.bf16.msra.mxu0 0
    %333 = vmatprep.subr.bf16.mxu0 0
    %334 = vmatpush1.bf16.msra.mxu0 0
    %335 = vmatprep.subr.bf16.mxu0 0
    %336 = vmatpush1.bf16.msra.mxu0 0
    %337 = vmatprep.subr.bf16.mxu0 0
    %338 = vmatpush1.bf16.msra.mxu0 0
    %339 = vmatprep.subr.bf16.mxu0 0
    %340 = vmatpush1.bf16.msra.mxu0 0
    %341 = vmatprep.subr.bf16.mxu0 0
    %342 = vmatpush1.bf16.msra.mxu0 0
    %343 = vmatprep.mubr.bf16.mxu0 0
    %344 = vmatmul.mubr.bf16.gmra.mrb[0].mxu0 %v214
    %v345 = vpop.f32.mrb[0].mxu0
    %v346 = vadd.f32 0.0, %v345
    %v347 = vpop.f32.mrb[0].mxu0
    %v348 = vadd.f32 0.0, %v347
    %v349 = vpop.f32.mrb[0].mxu0
    %v350 = vadd.f32 0.0, %v349
    %v351 = vpop.f32.mrb[0].mxu0
    %v352 = vadd.f32 0.0, %v351
    %353 = vdwg.mxu0
    %v354 = vlaneseq
    %v355 = vshrl.u32 %v354, 7
    %v356 = vsub.s32 3, %v355
    %v357 = vrot.slane %v110, %v356
    %v358 = vadd.f32 %v346, %v357
    %v359 = vadd.f32 %v350, %v357
    %v360 = vlaneseq
    %v361 = vshrl.u32 %v360, 7
    %v362 = vsub.s32 6, %v361
    %v363 = vrot.slane %v110, %v362
    %v364 = vadd.f32 %v348, %v363
    %v365 = vadd.f32 %v352, %v363
    %366 = vadd.xlane.f32.xlu0 %v358
    %v367 = vpop.xlane.xlu0 %366
    %368 = vadd.xlane.f32.xlu0 %v359
    %v369 = vpop.xlane.xlu0 %368
    %v370 = vmul.f32 %v367, 0.03125
    %v371 = vmul.f32 %v369, 0.03125
    %v372 = vmul.f32 %v358, %v358
    %v373 = vmul.f32 %v359, %v359
    %374 = vadd.xlane.f32.xlu0 %v372
    %v375 = vpop.xlane.xlu0 %374
    %376 = vadd.xlane.f32.xlu0 %v373
    %v377 = vpop.xlane.xlu0 %376
    %v378 = vmul.f32 %v375, 0.03125
    %v379 = vmul.f32 %v377, 0.03125
    %v380 = vmul.f32 %v370, %v370
    %v381 = vmul.f32 %v371, %v371
    %v382 = vsub.f32 %v378, %v380
    %v383 = vsub.f32 %v379, %v381
    %v384 = vmax.f32 %v382, 0.0
    %v385 = vmax.f32 %v383, 0.0
    %v386 = vsub.f32 %v358, %v370
    %v387 = vsub.f32 %v359, %v371
    %v388 = vadd.f32 %v384, 1e-05
    %v389 = vadd.f32 %v385, 1e-05
    %v390 = vrsqrt.pop %v388
    %v391 = vrsqrt.pop %v389
    %v392 = vmul.f32 %v386, %v390
    %v393 = vmul.f32 %v387, %v391
    %v394 = vlaneseq
    %v395 = vshrl.u32 %v394, 7
    %v396 = vsub.s32 4, %v395
    %v397 = vrot.slane %v110, %v396
    %v398 = vmul.f32 %v392, %v397
    %v399 = vmul.f32 %v393, %v397
    %v400 = vlaneseq
    %v401 = vshrl.u32 %v400, 7
    %v402 = vsub.s32 5, %v401
    %v403 = vrot.slane %v110, %v402
    %v404 = vadd.f32 %v398, %v403
    %v405 = vadd.f32 %v399, %v403
    %v406 = vmax.f32 %v404, 0.0
    %v407 = vmax.f32 %v405, 0.0
    %v408 = vadd.f32 %v406, %v364
    %v409 = vadd.f32 %v407, %v365
    %v410 = vpack.c.bf16 %v409, %v408
    %v411 = vld [vmem:[#allocation8] sm:$0xf]
    %v412 = vld [vmem:[#allocation8 + $0x4] sm:$0xf]
    %v413 = vld [vmem:[#allocation8 + $0x8] sm:$0xf]
    %v414 = vld [vmem:[#allocation8 + $0xc] sm:$0xf]
    %v415 = vld [vmem:[#allocation8 + $0x10] sm:$0xf]
    %v416 = vld [vmem:[#allocation8 + $0x14] sm:$0xf]
    %v417 = vld [vmem:[#allocation8 + $0x18] sm:$0xf]
    %v418 = vld [vmem:[#allocation8 + $0x1c] sm:$0xf]
    %v419 = vld [vmem:[#allocation8 + $0x20] sm:$0xf]
    %v420 = vld [vmem:[#allocation8 + $0x24] sm:$0xf]
    %v421 = vld [vmem:[#allocation8 + $0x28] sm:$0xf]
    %v422 = vld [vmem:[#allocation8 + $0x2c] sm:$0xf]
    %v423 = vld [vmem:[#allocation8 + $0x30] sm:$0xf]
    %v424 = vld [vmem:[#allocation8 + $0x34] sm:$0xf]
    %v425 = vld [vmem:[#allocation8 + $0x38] sm:$0xf]
    %v426 = vld [vmem:[#allocation8 + $0x3c] sm:$0xf]
    %v427 = vlaneseq
    %v428 = vshrl.u32 %v427, 7
    %v429 = vsub.s32 7, %v428
    %v430 = vrot.slane %v110, %v429
    %v447 = vunpack.c.l.b16 %v411
    %v448 = vunpack.c.l.b16 %v412
    %v449 = vunpack.c.l.b16 %v413
    %v450 = vunpack.c.l.b16 %v414
    %v451 = vunpack.c.l.b16 %v415
    %v452 = vunpack.c.l.b16 %v416
    %v453 = vunpack.c.l.b16 %v417
    %v454 = vunpack.c.l.b16 %v418
    %v455 = vunpack.c.l.b16 %v419
    %v456 = vunpack.c.l.b16 %v420
    %v457 = vunpack.c.l.b16 %v421
    %v458 = vunpack.c.l.b16 %v422
    %v459 = vunpack.c.l.b16 %v423
    %v460 = vunpack.c.l.b16 %v424
    %v461 = vunpack.c.l.b16 %v425
    %v462 = vunpack.c.l.b16 %v426
    %v463 = vpack.c.b16 %v448, %v447
    %v464 = vpack.c.b16 %v450, %v449
    %v465 = vpack.c.b16 %v452, %v451
    %v466 = vpack.c.b16 %v454, %v453
    %v467 = vpack.c.b16 %v456, %v455
    %v468 = vpack.c.b16 %v458, %v457
    %v469 = vpack.c.b16 %v460, %v459
    %v470 = vpack.c.b16 %v462, %v461
    %479 = vmatprep.subr.bf16.mxu0 0
    %480 = vmatpush1.bf16.msra.mxu0 %v463
    %481 = vmatprep.subr.bf16.mxu0 0
    %482 = vmatpush1.bf16.msra.mxu0 %v464
    %483 = vmatprep.subr.bf16.mxu0 0
    %484 = vmatpush1.bf16.msra.mxu0 %v465
    %485 = vmatprep.subr.bf16.mxu0 0
    %486 = vmatpush1.bf16.msra.mxu0 %v466
    %487 = vmatprep.subr.bf16.mxu0 0
    %488 = vmatpush1.bf16.msra.mxu0 %v467
    %489 = vmatprep.subr.bf16.mxu0 0
    %490 = vmatpush1.bf16.msra.mxu0 %v468
    %491 = vmatprep.subr.bf16.mxu0 0
    %492 = vmatpush1.bf16.msra.mxu0 %v469
    %493 = vmatprep.subr.bf16.mxu0 0
    %494 = vmatpush1.bf16.msra.mxu0 %v470
    %495 = vmatprep.subr.bf16.mxu0 0
    %496 = vmatpush1.bf16.msra.mxu0 0
    %497 = vmatprep.subr.bf16.mxu0 0
    %498 = vmatpush1.bf16.msra.mxu0 0
    %499 = vmatprep.subr.bf16.mxu0 0
    %500 = vmatpush1.bf16.msra.mxu0 0
    %501 = vmatprep.subr.bf16.mxu0 0
    %502 = vmatpush1.bf16.msra.mxu0 0
    %503 = vmatprep.subr.bf16.mxu0 0
    %504 = vmatpush1.bf16.msra.mxu0 0
    %505 = vmatprep.subr.bf16.mxu0 0
    %506 = vmatpush1.bf16.msra.mxu0 0
    %507 = vmatprep.subr.bf16.mxu0 0
    %508 = vmatpush1.bf16.msra.mxu0 0
    %509 = vmatprep.subr.bf16.mxu0 0
    %510 = vmatpush1.bf16.msra.mxu0 0
    %511 = vmatprep.mubr.bf16.mxu0 0
    %512 = vmatmul.mubr.bf16.gmra.mrb[0].mxu0 %v410
    %v513 = vpop.f32.mrb[0].mxu0
    %v514 = vadd.f32 %v430, %v513
    %v515 = vpop.f32.mrb[0].mxu0
    %v516 = vpop.f32.mrb[0].mxu0
    %v517 = vadd.f32 %v430, %v516
    %v518 = vpop.f32.mrb[0].mxu0
    %519 = vdwg.mxu0
    %520 = vadd.xlane.f32.xlu0 %v514
    %v521 = vpop.xlane.xlu0 %520
    %522 = vadd.xlane.f32.xlu0 %v517
    %v523 = vpop.xlane.xlu0 %522
    %v524 = vmul.f32 %v521, 0.03125
    %v525 = vmul.f32 %v523, 0.03125
    %v526 = vmul.f32 %v514, %v514
    %v527 = vmul.f32 %v517, %v517
    %528 = vadd.xlane.f32.xlu0 %v526
    %v529 = vpop.xlane.xlu0 %528
    %530 = vadd.xlane.f32.xlu0 %v527
    %v531 = vpop.xlane.xlu0 %530
    %v532 = vmul.f32 %v529, 0.03125
    %v533 = vmul.f32 %v531, 0.03125
    %v534 = vmul.f32 %v524, %v524
    %v535 = vmul.f32 %v525, %v525
    %v536 = vsub.f32 %v532, %v534
    %v537 = vsub.f32 %v533, %v535
    %v538 = vmax.f32 %v536, 0.0
    %v539 = vmax.f32 %v537, 0.0
    %v540 = vsub.f32 %v514, %v524
    %v541 = vsub.f32 %v517, %v525
    %v542 = vadd.f32 %v538, 1e-05
    %v543 = vadd.f32 %v539, 1e-05
    %v544 = vrsqrt.pop %v542
    %v545 = vrsqrt.pop %v543
    %v546 = vmul.f32 %v540, %v544
    %v547 = vmul.f32 %v541, %v545
    %v548 = vlaneseq
    %v549 = vshrl.u32 %v548, 7
    %v550 = vsub.s32 0, %v549
    %v551 = vrot.slane %v111, %v550
    %v552 = vmul.f32 %v546, %v551
    %v553 = vmul.f32 %v547, %v551
    %v554 = vlaneseq
    %v555 = vshrl.u32 %v554, 7
    %v556 = vsub.s32 1, %v555
    %v557 = vrot.slane %v111, %v556
    %v558 = vadd.f32 %v552, %v557
    %v559 = vadd.f32 %v553, %v557
    %v560 = vmax.f32 %v558, 0.0
    %v561 = vmax.f32 %v559, 0.0
    %v562 = vpack.c.bf16 %v561, %v560
    %v563 = vld [vmem:[#allocation10] sm:$0xf]
    %v564 = vld [vmem:[#allocation10 + $0x4] sm:$0xf]
    %v565 = vld [vmem:[#allocation10 + $0x8] sm:$0xf]
    %v566 = vld [vmem:[#allocation10 + $0xc] sm:$0xf]
    %v567 = vld [vmem:[#allocation10 + $0x10] sm:$0xf]
    %v568 = vld [vmem:[#allocation10 + $0x14] sm:$0xf]
    %v569 = vld [vmem:[#allocation10 + $0x18] sm:$0xf]
    %v570 = vld [vmem:[#allocation10 + $0x1c] sm:$0xf]
    %v571 = vld [vmem:[#allocation10 + $0x20] sm:$0xf]
    %v572 = vld [vmem:[#allocation10 + $0x24] sm:$0xf]
    %v573 = vld [vmem:[#allocation10 + $0x28] sm:$0xf]
    %v574 = vld [vmem:[#allocation10 + $0x2c] sm:$0xf]
    %v575 = vld [vmem:[#allocation10 + $0x30] sm:$0xf]
    %v576 = vld [vmem:[#allocation10 + $0x34] sm:$0xf]
    %v577 = vld [vmem:[#allocation10 + $0x38] sm:$0xf]
    %v578 = vld [vmem:[#allocation10 + $0x3c] sm:$0xf]
    %v579 = vlaneseq
    %v580 = vshrl.u32 %v579, 7
    %v581 = vsub.s32 2, %v580
    %v582 = vrot.slane %v111, %v581
    %v599 = vunpack.c.l.b16 %v563
    %v600 = vunpack.c.l.b16 %v564
    %v601 = vunpack.c.l.b16 %v565
    %v602 = vunpack.c.l.b16 %v566
    %v603 = vunpack.c.l.b16 %v567
    %v604 = vunpack.c.l.b16 %v568
    %v605 = vunpack.c.l.b16 %v569
    %v606 = vunpack.c.l.b16 %v570
    %v607 = vunpack.c.l.b16 %v571
    %v608 = vunpack.c.l.b16 %v572
    %v609 = vunpack.c.l.b16 %v573
    %v610 = vunpack.c.l.b16 %v574
    %v611 = vunpack.c.l.b16 %v575
    %v612 = vunpack.c.l.b16 %v576
    %v613 = vunpack.c.l.b16 %v577
    %v614 = vunpack.c.l.b16 %v578
    %v615 = vpack.c.b16 %v600, %v599
    %v616 = vpack.c.b16 %v602, %v601
    %v617 = vpack.c.b16 %v604, %v603
    %v618 = vpack.c.b16 %v606, %v605
    %v619 = vpack.c.b16 %v608, %v607
    %v620 = vpack.c.b16 %v610, %v609
    %v621 = vpack.c.b16 %v612, %v611
    %v622 = vpack.c.b16 %v614, %v613
    %631 = vmatprep.subr.bf16.mxu0 0
    %632 = vmatpush1.bf16.msra.mxu0 %v615
    %633 = vmatprep.subr.bf16.mxu0 0
    %634 = vmatpush1.bf16.msra.mxu0 %v616
    %635 = vmatprep.subr.bf16.mxu0 0
    %636 = vmatpush1.bf16.msra.mxu0 %v617
    %637 = vmatprep.subr.bf16.mxu0 0
    %638 = vmatpush1.bf16.msra.mxu0 %v618
    %639 = vmatprep.subr.bf16.mxu0 0
    %640 = vmatpush1.bf16.msra.mxu0 %v619
    %641 = vmatprep.subr.bf16.mxu0 0
    %642 = vmatpush1.bf16.msra.mxu0 %v620
    %643 = vmatprep.subr.bf16.mxu0 0
    %644 = vmatpush1.bf16.msra.mxu0 %v621
    %645 = vmatprep.subr.bf16.mxu0 0
    %646 = vmatpush1.bf16.msra.mxu0 %v622
    %647 = vmatprep.subr.bf16.mxu0 0
    %648 = vmatpush1.bf16.msra.mxu0 0
    %649 = vmatprep.subr.bf16.mxu0 0
    %650 = vmatpush1.bf16.msra.mxu0 0
    %651 = vmatprep.subr.bf16.mxu0 0
    %652 = vmatpush1.bf16.msra.mxu0 0
    %653 = vmatprep.subr.bf16.mxu0 0
    %654 = vmatpush1.bf16.msra.mxu0 0
    %655 = vmatprep.subr.bf16.mxu0 0
    %656 = vmatpush1.bf16.msra.mxu0 0
    %657 = vmatprep.subr.bf16.mxu0 0
    %658 = vmatpush1.bf16.msra.mxu0 0
    %659 = vmatprep.subr.bf16.mxu0 0
    %660 = vmatpush1.bf16.msra.mxu0 0
    %661 = vmatprep.subr.bf16.mxu0 0
    %662 = vmatpush1.bf16.msra.mxu0 0
    %663 = vmatprep.mubr.bf16.mxu0 0
    %664 = vmatmul.mubr.bf16.gmra.mrb[0].mxu0 %v562
    %v665 = vpop.f32.mrb[0].mxu0
    %v666 = vadd.f32 %v582, %v665
    %v667 = vpop.f32.mrb[0].mxu0
    %v668 = vpop.f32.mrb[0].mxu0
    %v669 = vadd.f32 %v582, %v668
    %v670 = vpop.f32.mrb[0].mxu0
    %671 = vdwg.mxu0
    %672 = vadd.xlane.f32.xlu0 %v666
    %v673 = vpop.xlane.xlu0 %672
    %674 = vadd.xlane.f32.xlu0 %v669
    %v675 = vpop.xlane.xlu0 %674
    %v676 = vmul.f32 %v673, 0.03125
    %v677 = vmul.f32 %v675, 0.03125
    %v678 = vmul.f32 %v666, %v666
    %v679 = vmul.f32 %v669, %v669
    %680 = vadd.xlane.f32.xlu0 %v678
    %v681 = vpop.xlane.xlu0 %680
    %682 = vadd.xlane.f32.xlu0 %v679
    %v683 = vpop.xlane.xlu0 %682
    %v684 = vmul.f32 %v681, 0.03125
    %v685 = vmul.f32 %v683, 0.03125
    %v686 = vmul.f32 %v676, %v676
    %v687 = vmul.f32 %v677, %v677
    %v688 = vsub.f32 %v684, %v686
    %v689 = vsub.f32 %v685, %v687
    %v690 = vmax.f32 %v688, 0.0
    %v691 = vmax.f32 %v689, 0.0
    %v692 = vsub.f32 %v666, %v676
    %v693 = vsub.f32 %v669, %v677
    %v694 = vadd.f32 %v690, 1e-05
    %v695 = vadd.f32 %v691, 1e-05
    %v696 = vrsqrt.pop %v694
    %v697 = vrsqrt.pop %v695
    %v698 = vmul.f32 %v692, %v696
    %v699 = vmul.f32 %v693, %v697
    %v700 = vlaneseq
    %v701 = vshrl.u32 %v700, 7
    %v702 = vsub.s32 3, %v701
    %v703 = vrot.slane %v111, %v702
    %v704 = vmul.f32 %v698, %v703
    %v705 = vmul.f32 %v699, %v703
    %v706 = vlaneseq
    %v707 = vshrl.u32 %v706, 7
    %v708 = vsub.s32 4, %v707
    %v709 = vrot.slane %v111, %v708
    %v710 = vadd.f32 %v704, %v709
    %v711 = vadd.f32 %v705, %v709
    %v712 = vmax.f32 %v710, 0.0
    %v713 = vmax.f32 %v711, 0.0
    %v714 = vpack.c.bf16 %v713, %v712
    %v715 = vld [vmem:[#allocation11] sm:$0xf]
    %v716 = vld [vmem:[#allocation11 + $0x4] sm:$0xf]
    %v717 = vld [vmem:[#allocation11 + $0x8] sm:$0xf]
    %v718 = vld [vmem:[#allocation11 + $0xc] sm:$0xf]
    %v719 = vld [vmem:[#allocation11 + $0x10] sm:$0xf]
    %v720 = vld [vmem:[#allocation11 + $0x14] sm:$0xf]
    %v721 = vld [vmem:[#allocation11 + $0x18] sm:$0xf]
    %v722 = vld [vmem:[#allocation11 + $0x1c] sm:$0xf]
    %v723 = vld [vmem:[#allocation11 + $0x20] sm:$0xf]
    %v724 = vld [vmem:[#allocation11 + $0x24] sm:$0xf]
    %v725 = vld [vmem:[#allocation11 + $0x28] sm:$0xf]
    %v726 = vld [vmem:[#allocation11 + $0x2c] sm:$0xf]
    %v727 = vld [vmem:[#allocation11 + $0x30] sm:$0xf]
    %v728 = vld [vmem:[#allocation11 + $0x34] sm:$0xf]
    %v729 = vld [vmem:[#allocation11 + $0x38] sm:$0xf]
    %v730 = vld [vmem:[#allocation11 + $0x3c] sm:$0xf]
    %v731 = vlaneseq
    %v732 = vshrl.u32 %v731, 7
    %v733 = vsub.s32 5, %v732
    %v734 = vrot.slane %v111, %v733
    %v751 = vunpack.c.l.b16 %v715
    %v752 = vunpack.c.l.b16 %v716
    %v753 = vunpack.c.l.b16 %v717
    %v754 = vunpack.c.l.b16 %v718
    %v755 = vunpack.c.l.b16 %v719
    %v756 = vunpack.c.l.b16 %v720
    %v757 = vunpack.c.l.b16 %v721
    %v758 = vunpack.c.l.b16 %v722
    %v759 = vunpack.c.l.b16 %v723
    %v760 = vunpack.c.l.b16 %v724
    %v761 = vunpack.c.l.b16 %v725
    %v762 = vunpack.c.l.b16 %v726
    %v763 = vunpack.c.l.b16 %v727
    %v764 = vunpack.c.l.b16 %v728
    %v765 = vunpack.c.l.b16 %v729
    %v766 = vunpack.c.l.b16 %v730
    %v767 = vpack.c.b16 %v752, %v751
    %v768 = vpack.c.b16 %v754, %v753
    %v769 = vpack.c.b16 %v756, %v755
    %v770 = vpack.c.b16 %v758, %v757
    %v771 = vpack.c.b16 %v760, %v759
    %v772 = vpack.c.b16 %v762, %v761
    %v773 = vpack.c.b16 %v764, %v763
    %v774 = vpack.c.b16 %v766, %v765
    %783 = vmatprep.subr.bf16.mxu0 0
    %784 = vmatpush1.bf16.msra.mxu0 %v767
    %785 = vmatprep.subr.bf16.mxu0 0
    %786 = vmatpush1.bf16.msra.mxu0 %v768
    %787 = vmatprep.subr.bf16.mxu0 0
    %788 = vmatpush1.bf16.msra.mxu0 %v769
    %789 = vmatprep.subr.bf16.mxu0 0
    %790 = vmatpush1.bf16.msra.mxu0 %v770
    %791 = vmatprep.subr.bf16.mxu0 0
    %792 = vmatpush1.bf16.msra.mxu0 %v771
    %793 = vmatprep.subr.bf16.mxu0 0
    %794 = vmatpush1.bf16.msra.mxu0 %v772
    %795 = vmatprep.subr.bf16.mxu0 0
    %796 = vmatpush1.bf16.msra.mxu0 %v773
    %797 = vmatprep.subr.bf16.mxu0 0
    %798 = vmatpush1.bf16.msra.mxu0 %v774
    %799 = vmatprep.subr.bf16.mxu0 0
    %800 = vmatpush1.bf16.msra.mxu0 0
    %801 = vmatprep.subr.bf16.mxu0 0
    %802 = vmatpush1.bf16.msra.mxu0 0
    %803 = vmatprep.subr.bf16.mxu0 0
    %804 = vmatpush1.bf16.msra.mxu0 0
    %805 = vmatprep.subr.bf16.mxu0 0
    %806 = vmatpush1.bf16.msra.mxu0 0
    %807 = vmatprep.subr.bf16.mxu0 0
    %808 = vmatpush1.bf16.msra.mxu0 0
    %809 = vmatprep.subr.bf16.mxu0 0
    %810 = vmatpush1.bf16.msra.mxu0 0
    %811 = vmatprep.subr.bf16.mxu0 0
    %812 = vmatpush1.bf16.msra.mxu0 0
    %813 = vmatprep.subr.bf16.mxu0 0
    %814 = vmatpush1.bf16.msra.mxu0 0
    %815 = vmatprep.mubr.bf16.mxu0 0
    %816 = vmatmul.mubr.bf16.gmra.mrb[0].mxu0 %v714
    %v817 = vpop.f32.mrb[0].mxu0
    %v818 = vadd.f32 %v734, %v817
    %v819 = vpop.f32.mrb[0].mxu0
    %v820 = vpop.f32.mrb[0].mxu0
    %v821 = vadd.f32 %v734, %v820
    %v822 = vpop.f32.mrb[0].mxu0
    %823 = vdwg.mxu0
    %824 = vst [vmem:[#allocation13] sm:$0xff] %v818
    %825 = vst [vmem:[#allocation13 + $0x8] sm:$0xff] %v821
    // Predicated region
    $region54: #{tpu_custom_call.1} parent=1 // pred_check
      _
    $region55: #{tpu_custom_call.1} parent=1 // pred_check_branch
      %827 = sbr.rel (0) target = $region57
    $region56: #{tpu_custom_call.1} parent=1 // pred_region
      %s829 = ssub.s32 256, 256
      %830 = vsyncadd [#allocation4], %s829
      %s831 = sshll.u32 [#allocation13], 4
      %s832 = int_to_ptr.vmem [resolvable:$true] %s831
      %837 = dma.vmem_to_hbm [thread:$0]  %s832, 256, %s7, [#allocation4], 128, 128, 8
    $region57: #{tpu_custom_call.1} parent=1 // pred_fallthru
      _
    // Predicated region
    $region58: #{tpu_custom_call.1} parent=1 // pred_check
      _
    $region59: #{tpu_custom_call.1} parent=1 // pred_check_branch
      %839 = sbr.rel (0) target = $region61
    $region60: #{tpu_custom_call.1} parent=1 // pred_region
      %840 = dma.done [#allocation4], 256
    $region61: #{tpu_custom_call.1} parent=1 // pred_fallthru
      _
    %841 = vsyncpa [#allocation3], 1
    %842 = vsyncpa [#allocation6], 1
    %843 = vsyncpa [#allocation9], 1
    %844 = vsyncpa [#allocation12], 1
    %845 = vsyncpa [#allocation4], 1

// kernel: tpu_custom_call.1
$region0: #{tpu_custom_call.1}
  #allocation0 [shape = 'u32[]', space=smem, size = 0x4, offset = 0x4, fixed_abs, tag = 'smem constant byte address 0x4 - core index']
  #allocation1 [shape = 'u32[144,128]{1,0:T(1,128)}', space=vmem, size = 0x12000, scoped, tag = 'internal scratch']
  %s0 = inlined_call_operand.hbm [shape: f32[16,16], index: 0, kind: input, shape index: {}]
  %s1 = inlined_call_operand.hbm [shape: bf16[16,128], index: 1, kind: input, shape index: {}]
  %s2 = inlined_call_operand.hbm [shape: bf16[128,256], index: 2, kind: input, shape index: {}]
  %s3 = inlined_call_operand.hbm [shape: bf16[128,128], index: 3, kind: input, shape index: {}]
  %s4 = inlined_call_operand.hbm [shape: bf16[128,128], index: 4, kind: input, shape index: {}]
  %s5 = inlined_call_operand.hbm [shape: bf16[128,128], index: 5, kind: input, shape index: {}]
  %s6 = inlined_call_operand.vmem [shape: f32[16,128], index: 6, kind: input, shape index: {}]
  %s7 = inlined_call_operand.hbm [shape: f32[16,128], index: 7, kind: output, shape index: {}]
  %s8 = sld [smem:[#allocation0]]
  $region62: #{tpu_custom_call.1} parent=0
    _
  %s10 = ssub.s32 1, %s8
  %s11 = scalar_select 0, %s10, %s8
  $region1: #{tpu_custom_call.1} parent=0
    #allocation2 [shape = 'u8[8192]{0}', space=vmem, size = 0x2000, scoped, tag = 'input window, operand 0, single buffered']
    #allocation3 [shape = 's32[1]{0}', space=sflag, size = 0x4, scoped, tag = 'scoped memory for tpu_custom_call.1']
    #allocation4 [shape = 's32[1]{0}', space=sflag, size = 0x4, scoped, tag = 'scoped memory for tpu_custom_call.1']
    #allocation5 [shape = 'u8[4096]{0}', space=vmem, size = 0x1000, scoped, tag = 'input window, operand 1, single buffered']
    #allocation6 [shape = 's32[1]{0}', space=sflag, size = 0x4, scoped, tag = 'scoped memory for tpu_custom_call.1']
    #allocation7 [shape = 'u8[65536]{0}', space=vmem, size = 0x10000, scoped, tag = 'input window, operand 2, single buffered']
    #allocation8 [shape = 'u8[32768]{0}', space=vmem, size = 0x8000, scoped, tag = 'input window, operand 3, single buffered']
    #allocation9 [shape = 's32[1]{0}', space=sflag, size = 0x4, scoped, tag = 'scoped memory for tpu_custom_call.1']
    #allocation10 [shape = 'u8[32768]{0}', space=vmem, size = 0x8000, scoped, tag = 'input window, operand 4, single buffered']
    #allocation11 [shape = 'u8[32768]{0}', space=vmem, size = 0x8000, scoped, tag = 'input window, operand 5, single buffered']
    #allocation12 [shape = 's32[1]{0}', space=sflag, size = 0x4, scoped, tag = 'scoped memory for tpu_custom_call.1']
    #allocation13 [shape = 'u8[8192]{0}', space=vmem, size = 0x2000, scoped, tag = 'output window, operand 0, single buffered']
    %12 = vsyncpa [#allocation3], 0
    %13 = vsyncpa [#allocation6], 0
    %14 = vsyncpa [#allocation9], 0
    %15 = vsyncpa [#allocation12], 0
    %16 = vsyncpa [#allocation4], 0
    // Predicated region
    $region2: #{tpu_custom_call.1} parent=1 // pred_check
      _
    $region3: #{tpu_custom_call.1} parent=1 // pred_check_branch
      %18 = sbr.rel (0) target = $region5
    $region4: #{tpu_custom_call.1} parent=1 // pred_region
      %s20 = ssub.s32 256, 256
      %21 = vsyncadd [#allocation3], %s20
      %s22 = sshll.u32 [#allocation2], 4
      %s23 = int_to_ptr.vmem [resolvable:$true] %s22
      %28 = dma.hbm_to_vmem [thread:$0]  %s0, 256, %s23, [#allocation3], 128, 128, 8
    $region5: #{tpu_custom_call.1} parent=1 // pred_fallthru
      _
    // Predicated region
    $region6: #{tpu_custom_call.1} parent=1 // pred_check
      _
    $region7: #{tpu_custom_call.1} parent=1 // pred_check_branch
      %30 = sbr.rel (0) target = $region9
    $region8: #{tpu_custom_call.1} parent=1 // pred_region
      %s32 = ssub.s32 128, 128
      %33 = vsyncadd [#allocation6], %s32
      %s34 = sshll.u32 [#allocation5], 4
      %s35 = int_to_ptr.vmem [resolvable:$true] %s34
      %40 = dma.hbm_to_vmem [thread:$0]  %s1, 128, %s35, [#allocation6], 64, 64, 4
    $region9: #{tpu_custom_call.1} parent=1 // pred_fallthru
      _
    // Predicated region
    $region10: #{tpu_custom_call.1} parent=1 // pred_check
      _
    $region11: #{tpu_custom_call.1} parent=1 // pred_check_branch
      %42 = sbr.rel (0) target = $region13
    $region12: #{tpu_custom_call.1} parent=1 // pred_region
      %s44 = ssub.s32 2048, 2048
      %45 = vsyncadd [#allocation6], %s44
      %s46 = sshll.u32 [#allocation7], 4
      %s47 = int_to_ptr.vmem [resolvable:$true] %s46
      %52 = dma.hbm_to_vmem [thread:$0]  %s2, 2048, %s47, [#allocation6], 128, 128, 8
    $region13: #{tpu_custom_call.1} parent=1 // pred_fallthru
      _
    // Predicated region
    $region14: #{tpu_custom_call.1} parent=1 // pred_check
      _
    $region15: #{tpu_custom_call.1} parent=1 // pred_check_branch
      %54 = sbr.rel (0) target = $region17
    $region16: #{tpu_custom_call.1} parent=1 // pred_region
      %s56 = ssub.s32 1024, 1024
      %57 = vsyncadd [#allocation9], %s56
      %s58 = sshll.u32 [#allocation8], 4
      %s59 = int_to_ptr.vmem [resolvable:$true] %s58
      %64 = dma.hbm_to_vmem [thread:$0]  %s3, 1024, %s59, [#allocation9], 64, 64, 4
    $region17: #{tpu_custom_call.1} parent=1 // pred_fallthru
      _
    // Predicated region
    $region18: #{tpu_custom_call.1} parent=1 // pred_check
      _
    $region19: #{tpu_custom_call.1} parent=1 // pred_check_branch
      %66 = sbr.rel (0) target = $region21
    $region20: #{tpu_custom_call.1} parent=1 // pred_region
      %s68 = ssub.s32 1024, 1024
      %69 = vsyncadd [#allocation9], %s68
      %s70 = sshll.u32 [#allocation10], 4
      %s71 = int_to_ptr.vmem [resolvable:$true] %s70
      %76 = dma.hbm_to_vmem [thread:$0]  %s4, 1024, %s71, [#allocation9], 64, 64, 4
    $region21: #{tpu_custom_call.1} parent=1 // pred_fallthru
      _
    // Predicated region
    $region22: #{tpu_custom_call.1} parent=1 // pred_check
      _
    $region23: #{tpu_custom_call.1} parent=1 // pred_check_branch
      %78 = sbr.rel (0) target = $region25
    $region24: #{tpu_custom_call.1} parent=1 // pred_region
      %s80 = ssub.s32 1024, 1024
      %81 = vsyncadd [#allocation12], %s80
      %s82 = sshll.u32 [#allocation11], 4
      %s83 = int_to_ptr.vmem [resolvable:$true] %s82
      %88 = dma.hbm_to_vmem [thread:$0]  %s5, 1024, %s83, [#allocation12], 64, 64, 4
    $region25: #{tpu_custom_call.1} parent=1 // pred_fallthru
      _
    // Predicated region
    $region26: #{tpu_custom_call.1} parent=1 // pred_check
      _
    $region27: #{tpu_custom_call.1} parent=1 // pred_check_branch
      %90 = sbr.rel (0) target = $region29
    $region28: #{tpu_custom_call.1} parent=1 // pred_region
      _
    $region29: #{tpu_custom_call.1} parent=1 // pred_fallthru
      _
    // Predicated region
    $region30: #{tpu_custom_call.1} parent=1 // pred_check
      _
    $region31: #{tpu_custom_call.1} parent=1 // pred_check_branch
      %92 = sbr.rel (0) target = $region33
    $region32: #{tpu_custom_call.1} parent=1 // pred_region
      %93 = dma.done [#allocation3], 256
    $region33: #{tpu_custom_call.1} parent=1 // pred_fallthru
      _
    // Predicated region
    $region34: #{tpu_custom_call.1} parent=1 // pred_check
      _
    $region35: #{tpu_custom_call.1} parent=1 // pred_check_branch
      %95 = sbr.rel (0) target = $region37
    $region36: #{tpu_custom_call.1} parent=1 // pred_region
      %96 = dma.done [#allocation6], 128
    $region37: #{tpu_custom_call.1} parent=1 // pred_fallthru
      _
    // Predicated region
    $region38: #{tpu_custom_call.1} parent=1 // pred_check
      _
    $region39: #{tpu_custom_call.1} parent=1 // pred_check_branch
      %98 = sbr.rel (0) target = $region41
    $region40: #{tpu_custom_call.1} parent=1 // pred_region
      %99 = dma.done [#allocation6], 2048
    $region41: #{tpu_custom_call.1} parent=1 // pred_fallthru
      _
    // Predicated region
    $region42: #{tpu_custom_call.1} parent=1 // pred_check
      _
    $region43: #{tpu_custom_call.1} parent=1 // pred_check_branch
      %101 = sbr.rel (0) target = $region45
    $region44: #{tpu_custom_call.1} parent=1 // pred_region
      %102 = dma.done [#allocation9], 1024
    $region45: #{tpu_custom_call.1} parent=1 // pred_fallthru
      _
    // Predicated region
    $region46: #{tpu_custom_call.1} parent=1 // pred_check
      _
    $region47: #{tpu_custom_call.1} parent=1 // pred_check_branch
      %104 = sbr.rel (0) target = $region49
    $region48: #{tpu_custom_call.1} parent=1 // pred_region
      %105 = dma.done [#allocation9], 1024
    $region49: #{tpu_custom_call.1} parent=1 // pred_fallthru
      _
    // Predicated region
    $region50: #{tpu_custom_call.1} parent=1 // pred_check
      _
    $region51: #{tpu_custom_call.1} parent=1 // pred_check_branch
      %107 = sbr.rel (0) target = $region53
    $region52: #{tpu_custom_call.1} parent=1 // pred_region
      %108 = dma.done [#allocation12], 1024
    $region53: #{tpu_custom_call.1} parent=1 // pred_fallthru
      _
    %v110 = vld [vmem:[%s6] sm:$0xff]
    %v111 = vld [vmem:[%s6 + $0x8] sm:$0xff]
    %v112 = vld [vmem:[#allocation2] sm:$0xff]
    %v113 = vld [vmem:[#allocation2 + $0x8] sm:$0xff]
    %v114 = vpack.c.bf16 %v113, %v112
    %v115 = vld [vmem:[#allocation5] sm:$0xf]
    %v116 = vld [vmem:[#allocation5 + $0x4] sm:$0xf]
    %v117 = vlaneseq
    %v118 = vshrl.u32 %v117, 7
    %v119 = vsub.s32 0, %v118
    %v120 = vrot.slane %v110, %v119
    %v123 = vunpack.c.l.b16 %v115
    %v124 = vunpack.c.l.b16 %v116
    %v125 = vpack.c.b16 %v124, %v123
    %vm127 = vcmask 130048
    %v129 = vsel %vm127, %v114, 0
    %131 = vmatprep.subr.bf16.mxu0 0
    %132 = vmatpush1.bf16.msra.mxu0 %v125
    %133 = vmatprep.subr.bf16.mxu0 0
    %134 = vmatpush1.bf16.msra.mxu0 0
    %135 = vmatprep.subr.bf16.mxu0 0
    %136 = vmatpush1.bf16.msra.mxu0 0
    %137 = vmatprep.subr.bf16.mxu0 0
    %138 = vmatpush1.bf16.msra.mxu0 0
    %139 = vmatprep.subr.bf16.mxu0 0
    %140 = vmatpush1.bf16.msra.mxu0 0
    %141 = vmatprep.subr.bf16.mxu0 0
    %142 = vmatpush1.bf16.msra.mxu0 0
    %143 = vmatprep.subr.bf16.mxu0 0
    %144 = vmatpush1.bf16.msra.mxu0 0
    %145 = vmatprep.subr.bf16.mxu0 0
    %146 = vmatpush1.bf16.msra.mxu0 0
    %147 = vmatprep.subr.bf16.mxu0 0
    %148 = vmatpush1.bf16.msra.mxu0 0
    %149 = vmatprep.subr.bf16.mxu0 0
    %150 = vmatpush1.bf16.msra.mxu0 0
    %151 = vmatprep.subr.bf16.mxu0 0
    %152 = vmatpush1.bf16.msra.mxu0 0
    %153 = vmatprep.subr.bf16.mxu0 0
    %154 = vmatpush1.bf16.msra.mxu0 0
    %155 = vmatprep.subr.bf16.mxu0 0
    %156 = vmatpush1.bf16.msra.mxu0 0
    %157 = vmatprep.subr.bf16.mxu0 0
    %158 = vmatpush1.bf16.msra.mxu0 0
    %159 = vmatprep.subr.bf16.mxu0 0
    %160 = vmatpush1.bf16.msra.mxu0 0
    %161 = vmatprep.subr.bf16.mxu0 0
    %162 = vmatpush1.bf16.msra.mxu0 0
    %163 = vmatprep.mubr.bf16.mxu0 0
    %164 = vmatmul.mubr.bf16.gmra.mrb[0].mxu0 %v129
    %v165 = vpop.f32.mrb[0].mxu0
    %v166 = vadd.f32 %v120, %v165
    %v167 = vpop.f32.mrb[0].mxu0
    %v168 = vpop.f32.mrb[0].mxu0
    %v169 = vadd.f32 %v120, %v168
    %v170 = vpop.f32.mrb[0].mxu0
    %171 = vdwg.mxu0
    %172 = vadd.xlane.f32.xlu0 %v166
    %v173 = vpop.xlane.xlu0 %172
    %174 = vadd.xlane.f32.xlu0 %v169
    %v175 = vpop.xlane.xlu0 %174
    %v176 = vmul.f32 %v173, 0.03125
    %v177 = vmul.f32 %v175, 0.03125
    %v178 = vmul.f32 %v166, %v166
    %v179 = vmul.f32 %v169, %v169
    %180 = vadd.xlane.f32.xlu0 %v178
    %v181 = vpop.xlane.xlu0 %180
    %182 = vadd.xlane.f32.xlu0 %v179
    %v183 = vpop.xlane.xlu0 %182
    %v184 = vmul.f32 %v181, 0.03125
    %v185 = vmul.f32 %v183, 0.03125
    %v186 = vmul.f32 %v176, %v176
    %v187 = vmul.f32 %v177, %v177
    %v188 = vsub.f32 %v184, %v186
    %v189 = vsub.f32 %v185, %v187
    %v190 = vmax.f32 %v188, 0.0
    %v191 = vmax.f32 %v189, 0.0
    %v192 = vsub.f32 %v166, %v176
    %v193 = vsub.f32 %v169, %v177
    %v194 = vadd.f32 %v190, 1e-05
    %v195 = vadd.f32 %v191, 1e-05
    %v196 = vrsqrt.pop %v194
    %v197 = vrsqrt.pop %v195
    %v198 = vmul.f32 %v192, %v196
    %v199 = vmul.f32 %v193, %v197
    %v200 = vlaneseq
    %v201 = vshrl.u32 %v200, 7
    %v202 = vsub.s32 1, %v201
    %v203 = vrot.slane %v110, %v202
    %v204 = vmul.f32 %v198, %v203
    %v205 = vmul.f32 %v199, %v203
    %v206 = vlaneseq
    %v207 = vshrl.u32 %v206, 7
    %v208 = vsub.s32 2, %v207
    %v209 = vrot.slane %v110, %v208
    %v210 = vadd.f32 %v204, %v209
    %v211 = vadd.f32 %v205, %v209
    %v212 = vmax.f32 %v210, 0.0
    %v213 = vmax.f32 %v211, 0.0
    %v214 = vpack.c.bf16 %v213, %v212
    %v215 = vld [vmem:[#allocation7] sm:$0xff]
    %v216 = vld [vmem:[#allocation7 + $0x8] sm:$0xff]
    %v217 = vld [vmem:[#allocation7 + $0x10] sm:$0xff]
    %v218 = vld [vmem:[#allocation7 + $0x18] sm:$0xff]
    %v219 = vld [vmem:[#allocation7 + $0x20] sm:$0xff]
    %v220 = vld [vmem:[#allocation7 + $0x28] sm:$0xff]
    %v221 = vld [vmem:[#allocation7 + $0x30] sm:$0xff]
    %v222 = vld [vmem:[#allocation7 + $0x38] sm:$0xff]
    %v223 = vld [vmem:[#allocation7 + $0x40] sm:$0xff]
    %v224 = vld [vmem:[#allocation7 + $0x48] sm:$0xff]
    %v225 = vld [vmem:[#allocation7 + $0x50] sm:$0xff]
    %v226 = vld [vmem:[#allocation7 + $0x58] sm:$0xff]
    %v227 = vld [vmem:[#allocation7 + $0x60] sm:$0xff]
    %v228 = vld [vmem:[#allocation7 + $0x68] sm:$0xff]
    %v229 = vld [vmem:[#allocation7 + $0x70] sm:$0xff]
    %v230 = vld [vmem:[#allocation7 + $0x78] sm:$0xff]
    %v247 = vunpack.c.l.b16 %v215
    %v248 = vunpack.c.h.b16 %v215
    %v249 = vunpack.c.l.b16 %v216
    %v250 = vunpack.c.h.b16 %v216
    %v251 = vunpack.c.l.b16 %v217
    %v252 = vunpack.c.h.b16 %v217
    %v253 = vunpack.c.l.b16 %v218
    %v254 = vunpack.c.h.b16 %v218
    %v255 = vunpack.c.l.b16 %v219
    %v256 = vunpack.c.h.b16 %v219
    %v257 = vunpack.c.l.b16 %v220
    %v258 = vunpack.c.h.b16 %v220
    %v259 = vunpack.c.l.b16 %v221
    %v260 = vunpack.c.h.b16 %v221
    %v261 = vunpack.c.l.b16 %v222
    %v262 = vunpack.c.h.b16 %v222
    %v263 = vunpack.c.l.b16 %v223
    %v264 = vunpack.c.h.b16 %v223
    %v265 = vunpack.c.l.b16 %v224
    %v266 = vunpack.c.h.b16 %v224
    %v267 = vunpack.c.l.b16 %v225
    %v268 = vunpack.c.h.b16 %v225
    %v269 = vunpack.c.l.b16 %v226
    %v270 = vunpack.c.h.b16 %v226
    %v271 = vunpack.c.l.b16 %v227
    %v272 = vunpack.c.h.b16 %v227
    %v273 = vunpack.c.l.b16 %v228
    %v274 = vunpack.c.h.b16 %v228
    %v275 = vunpack.c.l.b16 %v229
    %v276 = vunpack.c.h.b16 %v229
    %v277 = vunpack.c.l.b16 %v230
    %v278 = vunpack.c.h.b16 %v230
    %v279 = vpack.c.b16 %v249, %v247
    %v280 = vpack.c.b16 %v250, %v248
    %v281 = vpack.c.b16 %v253, %v251
    %v282 = vpack.c.b16 %v254, %v252
    %v283 = vpack.c.b16 %v257, %v255
    %v284 = vpack.c.b16 %v258, %v256
    %v285 = vpack.c.b16 %v261, %v259
    %v286 = vpack.c.b16 %v262, %v260
    %v287 = vpack.c.b16 %v265, %v263
    %v288 = vpack.c.b16 %v266, %v264
    %v289 = vpack.c.b16 %v269, %v267
    %v290 = vpack.c.b16 %v270, %v268
    %v291 = vpack.c.b16 %v273, %v271
    %v292 = vpack.c.b16 %v274, %v272
    %v293 = vpack.c.b16 %v277, %v275
    %v294 = vpack.c.b16 %v278, %v276
    %311 = vmatprep.subr.bf16.mxu0 %v280
    %312 = vmatpush1.bf16.msra.mxu0 %v279
    %313 = vmatprep.subr.bf16.mxu0 %v282
    %314 = vmatpush1.bf16.msra.mxu0 %v281
    %315 = vmatprep.subr.bf16.mxu0 %v284
    %316 = vmatpush1.bf16.msra.mxu0 %v283
    %317 = vmatprep.subr.bf16.mxu0 %v286
    %318 = vmatpush1.bf16.msra.mxu0 %v285
    %319 = vmatprep.subr.bf16.mxu0 %v288
    %320 = vmatpush1.bf16.msra.mxu0 %v287
    %321 = vmatprep.subr.bf16.mxu0 %v290
    %322 = vmatpush1.bf16.msra.mxu0 %v289
    %323 = vmatprep.subr.bf16.mxu0 %v292
    %324 = vmatpush1.bf16.msra.mxu0 %v291
    %325 = vmatprep.subr.bf16.mxu0 %v294
    %326 = vmatpush1.bf16.msra.mxu0 %v293
    %327 = vmatprep.subr.bf16.mxu0 0
    %328 = vmatpush1.bf16.msra.mxu0 0
    %329 = vmatprep.subr.bf16.mxu0 0
    %330 = vmatpush1.bf16.msra.mxu0 0
    %331 = vmatprep.subr.bf16.mxu0 0
    %332 = vmatpush1.bf16.msra.mxu0 0
    %333 = vmatprep.subr.bf16.mxu0 0
    %334 = vmatpush1.bf16.msra.mxu0 0
    %335 = vmatprep.subr.bf16.mxu0 0
    %336 = vmatpush1.bf16.msra.mxu0 0
    %337 = vmatprep.subr.bf16.mxu0 0
    %338 = vmatpush1.bf16.msra.mxu0 0
    %339 = vmatprep.subr.bf16.mxu0 0
    %340 = vmatpush1.bf16.msra.mxu0 0
    %341 = vmatprep.subr.bf16.mxu0 0
    %342 = vmatpush1.bf16.msra.mxu0 0
    %343 = vmatprep.mubr.bf16.mxu0 0
    %344 = vmatmul.mubr.bf16.gmra.mrb[0].mxu0 %v214
    %v345 = vpop.f32.mrb[0].mxu0
    %v346 = vadd.f32 0.0, %v345
    %v347 = vpop.f32.mrb[0].mxu0
    %v348 = vadd.f32 0.0, %v347
    %v349 = vpop.f32.mrb[0].mxu0
    %v350 = vadd.f32 0.0, %v349
    %v351 = vpop.f32.mrb[0].mxu0
    %v352 = vadd.f32 0.0, %v351
    %353 = vdwg.mxu0
    %v354 = vlaneseq
    %v355 = vshrl.u32 %v354, 7
    %v356 = vsub.s32 3, %v355
    %v357 = vrot.slane %v110, %v356
    %v358 = vadd.f32 %v346, %v357
    %v359 = vadd.f32 %v350, %v357
    %v360 = vlaneseq
    %v361 = vshrl.u32 %v360, 7
    %v362 = vsub.s32 6, %v361
    %v363 = vrot.slane %v110, %v362
    %v364 = vadd.f32 %v348, %v363
    %v365 = vadd.f32 %v352, %v363
    %366 = vadd.xlane.f32.xlu0 %v358
    %v367 = vpop.xlane.xlu0 %366
    %368 = vadd.xlane.f32.xlu0 %v359
    %v369 = vpop.xlane.xlu0 %368
    %v370 = vmul.f32 %v367, 0.03125
    %v371 = vmul.f32 %v369, 0.03125
    %v372 = vmul.f32 %v358, %v358
    %v373 = vmul.f32 %v359, %v359
    %374 = vadd.xlane.f32.xlu0 %v372
    %v375 = vpop.xlane.xlu0 %374
    %376 = vadd.xlane.f32.xlu0 %v373
    %v377 = vpop.xlane.xlu0 %376
    %v378 = vmul.f32 %v375, 0.03125
    %v379 = vmul.f32 %v377, 0.03125
    %v380 = vmul.f32 %v370, %v370
    %v381 = vmul.f32 %v371, %v371
    %v382 = vsub.f32 %v378, %v380
    %v383 = vsub.f32 %v379, %v381
    %v384 = vmax.f32 %v382, 0.0
    %v385 = vmax.f32 %v383, 0.0
    %v386 = vsub.f32 %v358, %v370
    %v387 = vsub.f32 %v359, %v371
    %v388 = vadd.f32 %v384, 1e-05
    %v389 = vadd.f32 %v385, 1e-05
    %v390 = vrsqrt.pop %v388
    %v391 = vrsqrt.pop %v389
    %v392 = vmul.f32 %v386, %v390
    %v393 = vmul.f32 %v387, %v391
    %v394 = vlaneseq
    %v395 = vshrl.u32 %v394, 7
    %v396 = vsub.s32 4, %v395
    %v397 = vrot.slane %v110, %v396
    %v398 = vmul.f32 %v392, %v397
    %v399 = vmul.f32 %v393, %v397
    %v400 = vlaneseq
    %v401 = vshrl.u32 %v400, 7
    %v402 = vsub.s32 5, %v401
    %v403 = vrot.slane %v110, %v402
    %v404 = vadd.f32 %v398, %v403
    %v405 = vadd.f32 %v399, %v403
    %v406 = vmax.f32 %v404, 0.0
    %v407 = vmax.f32 %v405, 0.0
    %v408 = vadd.f32 %v406, %v364
    %v409 = vadd.f32 %v407, %v365
    %v410 = vpack.c.bf16 %v409, %v408
    %v411 = vld [vmem:[#allocation8] sm:$0xf]
    %v412 = vld [vmem:[#allocation8 + $0x4] sm:$0xf]
    %v413 = vld [vmem:[#allocation8 + $0x8] sm:$0xf]
    %v414 = vld [vmem:[#allocation8 + $0xc] sm:$0xf]
    %v415 = vld [vmem:[#allocation8 + $0x10] sm:$0xf]
    %v416 = vld [vmem:[#allocation8 + $0x14] sm:$0xf]
    %v417 = vld [vmem:[#allocation8 + $0x18] sm:$0xf]
    %v418 = vld [vmem:[#allocation8 + $0x1c] sm:$0xf]
    %v419 = vld [vmem:[#allocation8 + $0x20] sm:$0xf]
    %v420 = vld [vmem:[#allocation8 + $0x24] sm:$0xf]
    %v421 = vld [vmem:[#allocation8 + $0x28] sm:$0xf]
    %v422 = vld [vmem:[#allocation8 + $0x2c] sm:$0xf]
    %v423 = vld [vmem:[#allocation8 + $0x30] sm:$0xf]
    %v424 = vld [vmem:[#allocation8 + $0x34] sm:$0xf]
    %v425 = vld [vmem:[#allocation8 + $0x38] sm:$0xf]
    %v426 = vld [vmem:[#allocation8 + $0x3c] sm:$0xf]
    %v427 = vlaneseq
    %v428 = vshrl.u32 %v427, 7
    %v429 = vsub.s32 7, %v428
    %v430 = vrot.slane %v110, %v429
    %v447 = vunpack.c.l.b16 %v411
    %v448 = vunpack.c.l.b16 %v412
    %v449 = vunpack.c.l.b16 %v413
    %v450 = vunpack.c.l.b16 %v414
    %v451 = vunpack.c.l.b16 %v415
    %v452 = vunpack.c.l.b16 %v416
    %v453 = vunpack.c.l.b16 %v417
    %v454 = vunpack.c.l.b16 %v418
    %v455 = vunpack.c.l.b16 %v419
    %v456 = vunpack.c.l.b16 %v420
    %v457 = vunpack.c.l.b16 %v421
    %v458 = vunpack.c.l.b16 %v422
    %v459 = vunpack.c.l.b16 %v423
    %v460 = vunpack.c.l.b16 %v424
    %v461 = vunpack.c.l.b16 %v425
    %v462 = vunpack.c.l.b16 %v426
    %v463 = vpack.c.b16 %v448, %v447
    %v464 = vpack.c.b16 %v450, %v449
    %v465 = vpack.c.b16 %v452, %v451
    %v466 = vpack.c.b16 %v454, %v453
    %v467 = vpack.c.b16 %v456, %v455
    %v468 = vpack.c.b16 %v458, %v457
    %v469 = vpack.c.b16 %v460, %v459
    %v470 = vpack.c.b16 %v462, %v461
    %479 = vmatprep.subr.bf16.mxu0 0
    %480 = vmatpush1.bf16.msra.mxu0 %v463
    %481 = vmatprep.subr.bf16.mxu0 0
    %482 = vmatpush1.bf16.msra.mxu0 %v464
    %483 = vmatprep.subr.bf16.mxu0 0
    %484 = vmatpush1.bf16.msra.mxu0 %v465
    %485 = vmatprep.subr.bf16.mxu0 0
    %486 = vmatpush1.bf16.msra.mxu0 %v466
    %487 = vmatprep.subr.bf16.mxu0 0
    %488 = vmatpush1.bf16.msra.mxu0 %v467
    %489 = vmatprep.subr.bf16.mxu0 0
    %490 = vmatpush1.bf16.msra.mxu0 %v468
    %491 = vmatprep.subr.bf16.mxu0 0
    %492 = vmatpush1.bf16.msra.mxu0 %v469
    %493 = vmatprep.subr.bf16.mxu0 0
    %494 = vmatpush1.bf16.msra.mxu0 %v470
    %495 = vmatprep.subr.bf16.mxu0 0
    %496 = vmatpush1.bf16.msra.mxu0 0
    %497 = vmatprep.subr.bf16.mxu0 0
    %498 = vmatpush1.bf16.msra.mxu0 0
    %499 = vmatprep.subr.bf16.mxu0 0
    %500 = vmatpush1.bf16.msra.mxu0 0
    %501 = vmatprep.subr.bf16.mxu0 0
    %502 = vmatpush1.bf16.msra.mxu0 0
    %503 = vmatprep.subr.bf16.mxu0 0
    %504 = vmatpush1.bf16.msra.mxu0 0
    %505 = vmatprep.subr.bf16.mxu0 0
    %506 = vmatpush1.bf16.msra.mxu0 0
    %507 = vmatprep.subr.bf16.mxu0 0
    %508 = vmatpush1.bf16.msra.mxu0 0
    %509 = vmatprep.subr.bf16.mxu0 0
    %510 = vmatpush1.bf16.msra.mxu0 0
    %511 = vmatprep.mubr.bf16.mxu0 0
    %512 = vmatmul.mubr.bf16.gmra.mrb[0].mxu0 %v410
    %v513 = vpop.f32.mrb[0].mxu0
    %v514 = vadd.f32 %v430, %v513
    %v515 = vpop.f32.mrb[0].mxu0
    %v516 = vpop.f32.mrb[0].mxu0
    %v517 = vadd.f32 %v430, %v516
    %v518 = vpop.f32.mrb[0].mxu0
    %519 = vdwg.mxu0
    %520 = vadd.xlane.f32.xlu0 %v514
    %v521 = vpop.xlane.xlu0 %520
    %522 = vadd.xlane.f32.xlu0 %v517
    %v523 = vpop.xlane.xlu0 %522
    %v524 = vmul.f32 %v521, 0.03125
    %v525 = vmul.f32 %v523, 0.03125
    %v526 = vmul.f32 %v514, %v514
    %v527 = vmul.f32 %v517, %v517
    %528 = vadd.xlane.f32.xlu0 %v526
    %v529 = vpop.xlane.xlu0 %528
    %530 = vadd.xlane.f32.xlu0 %v527
    %v531 = vpop.xlane.xlu0 %530
    %v532 = vmul.f32 %v529, 0.03125
    %v533 = vmul.f32 %v531, 0.03125
    %v534 = vmul.f32 %v524, %v524
    %v535 = vmul.f32 %v525, %v525
    %v536 = vsub.f32 %v532, %v534
    %v537 = vsub.f32 %v533, %v535
    %v538 = vmax.f32 %v536, 0.0
    %v539 = vmax.f32 %v537, 0.0
    %v540 = vsub.f32 %v514, %v524
    %v541 = vsub.f32 %v517, %v525
    %v542 = vadd.f32 %v538, 1e-05
    %v543 = vadd.f32 %v539, 1e-05
    %v544 = vrsqrt.pop %v542
    %v545 = vrsqrt.pop %v543
    %v546 = vmul.f32 %v540, %v544
    %v547 = vmul.f32 %v541, %v545
    %v548 = vlaneseq
    %v549 = vshrl.u32 %v548, 7
    %v550 = vsub.s32 0, %v549
    %v551 = vrot.slane %v111, %v550
    %v552 = vmul.f32 %v546, %v551
    %v553 = vmul.f32 %v547, %v551
    %v554 = vlaneseq
    %v555 = vshrl.u32 %v554, 7
    %v556 = vsub.s32 1, %v555
    %v557 = vrot.slane %v111, %v556
    %v558 = vadd.f32 %v552, %v557
    %v559 = vadd.f32 %v553, %v557
    %v560 = vmax.f32 %v558, 0.0
    %v561 = vmax.f32 %v559, 0.0
    %v562 = vpack.c.bf16 %v561, %v560
    %v563 = vld [vmem:[#allocation10] sm:$0xf]
    %v564 = vld [vmem:[#allocation10 + $0x4] sm:$0xf]
    %v565 = vld [vmem:[#allocation10 + $0x8] sm:$0xf]
    %v566 = vld [vmem:[#allocation10 + $0xc] sm:$0xf]
    %v567 = vld [vmem:[#allocation10 + $0x10] sm:$0xf]
    %v568 = vld [vmem:[#allocation10 + $0x14] sm:$0xf]
    %v569 = vld [vmem:[#allocation10 + $0x18] sm:$0xf]
    %v570 = vld [vmem:[#allocation10 + $0x1c] sm:$0xf]
    %v571 = vld [vmem:[#allocation10 + $0x20] sm:$0xf]
    %v572 = vld [vmem:[#allocation10 + $0x24] sm:$0xf]
    %v573 = vld [vmem:[#allocation10 + $0x28] sm:$0xf]
    %v574 = vld [vmem:[#allocation10 + $0x2c] sm:$0xf]
    %v575 = vld [vmem:[#allocation10 + $0x30] sm:$0xf]
    %v576 = vld [vmem:[#allocation10 + $0x34] sm:$0xf]
    %v577 = vld [vmem:[#allocation10 + $0x38] sm:$0xf]
    %v578 = vld [vmem:[#allocation10 + $0x3c] sm:$0xf]
    %v579 = vlaneseq
    %v580 = vshrl.u32 %v579, 7
    %v581 = vsub.s32 2, %v580
    %v582 = vrot.slane %v111, %v581
    %v599 = vunpack.c.l.b16 %v563
    %v600 = vunpack.c.l.b16 %v564
    %v601 = vunpack.c.l.b16 %v565
    %v602 = vunpack.c.l.b16 %v566
    %v603 = vunpack.c.l.b16 %v567
    %v604 = vunpack.c.l.b16 %v568
    %v605 = vunpack.c.l.b16 %v569
    %v606 = vunpack.c.l.b16 %v570
    %v607 = vunpack.c.l.b16 %v571
    %v608 = vunpack.c.l.b16 %v572
    %v609 = vunpack.c.l.b16 %v573
    %v610 = vunpack.c.l.b16 %v574
    %v611 = vunpack.c.l.b16 %v575
    %v612 = vunpack.c.l.b16 %v576
    %v613 = vunpack.c.l.b16 %v577
    %v614 = vunpack.c.l.b16 %v578
    %v615 = vpack.c.b16 %v600, %v599
    %v616 = vpack.c.b16 %v602, %v601
    %v617 = vpack.c.b16 %v604, %v603
    %v618 = vpack.c.b16 %v606, %v605
    %v619 = vpack.c.b16 %v608, %v607
    %v620 = vpack.c.b16 %v610, %v609
    %v621 = vpack.c.b16 %v612, %v611
    %v622 = vpack.c.b16 %v614, %v613
    %631 = vmatprep.subr.bf16.mxu0 0
    %632 = vmatpush1.bf16.msra.mxu0 %v615
    %633 = vmatprep.subr.bf16.mxu0 0
    %634 = vmatpush1.bf16.msra.mxu0 %v616
    %635 = vmatprep.subr.bf16.mxu0 0
    %636 = vmatpush1.bf16.msra.mxu0 %v617
    %637 = vmatprep.subr.bf16.mxu0 0
    %638 = vmatpush1.bf16.msra.mxu0 %v618
    %639 = vmatprep.subr.bf16.mxu0 0
    %640 = vmatpush1.bf16.msra.mxu0 %v619
    %641 = vmatprep.subr.bf16.mxu0 0
    %642 = vmatpush1.bf16.msra.mxu0 %v620
    %643 = vmatprep.subr.bf16.mxu0 0
    %644 = vmatpush1.bf16.msra.mxu0 %v621
    %645 = vmatprep.subr.bf16.mxu0 0
    %646 = vmatpush1.bf16.msra.mxu0 %v622
    %647 = vmatprep.subr.bf16.mxu0 0
    %648 = vmatpush1.bf16.msra.mxu0 0
    %649 = vmatprep.subr.bf16.mxu0 0
    %650 = vmatpush1.bf16.msra.mxu0 0
    %651 = vmatprep.subr.bf16.mxu0 0
    %652 = vmatpush1.bf16.msra.mxu0 0
    %653 = vmatprep.subr.bf16.mxu0 0
    %654 = vmatpush1.bf16.msra.mxu0 0
    %655 = vmatprep.subr.bf16.mxu0 0
    %656 = vmatpush1.bf16.msra.mxu0 0
    %657 = vmatprep.subr.bf16.mxu0 0
    %658 = vmatpush1.bf16.msra.mxu0 0
    %659 = vmatprep.subr.bf16.mxu0 0
    %660 = vmatpush1.bf16.msra.mxu0 0
    %661 = vmatprep.subr.bf16.mxu0 0
    %662 = vmatpush1.bf16.msra.mxu0 0
    %663 = vmatprep.mubr.bf16.mxu0 0
    %664 = vmatmul.mubr.bf16.gmra.mrb[0].mxu0 %v562
    %v665 = vpop.f32.mrb[0].mxu0
    %v666 = vadd.f32 %v582, %v665
    %v667 = vpop.f32.mrb[0].mxu0
    %v668 = vpop.f32.mrb[0].mxu0
    %v669 = vadd.f32 %v582, %v668
    %v670 = vpop.f32.mrb[0].mxu0
    %671 = vdwg.mxu0
    %672 = vadd.xlane.f32.xlu0 %v666
    %v673 = vpop.xlane.xlu0 %672
    %674 = vadd.xlane.f32.xlu0 %v669
    %v675 = vpop.xlane.xlu0 %674
    %v676 = vmul.f32 %v673, 0.03125
    %v677 = vmul.f32 %v675, 0.03125
    %v678 = vmul.f32 %v666, %v666
    %v679 = vmul.f32 %v669, %v669
    %680 = vadd.xlane.f32.xlu0 %v678
    %v681 = vpop.xlane.xlu0 %680
    %682 = vadd.xlane.f32.xlu0 %v679
    %v683 = vpop.xlane.xlu0 %682
    %v684 = vmul.f32 %v681, 0.03125
    %v685 = vmul.f32 %v683, 0.03125
    %v686 = vmul.f32 %v676, %v676
    %v687 = vmul.f32 %v677, %v677
    %v688 = vsub.f32 %v684, %v686
    %v689 = vsub.f32 %v685, %v687
    %v690 = vmax.f32 %v688, 0.0
    %v691 = vmax.f32 %v689, 0.0
    %v692 = vsub.f32 %v666, %v676
    %v693 = vsub.f32 %v669, %v677
    %v694 = vadd.f32 %v690, 1e-05
    %v695 = vadd.f32 %v691, 1e-05
    %v696 = vrsqrt.pop %v694
    %v697 = vrsqrt.pop %v695
    %v698 = vmul.f32 %v692, %v696
    %v699 = vmul.f32 %v693, %v697
    %v700 = vlaneseq
    %v701 = vshrl.u32 %v700, 7
    %v702 = vsub.s32 3, %v701
    %v703 = vrot.slane %v111, %v702
    %v704 = vmul.f32 %v698, %v703
    %v705 = vmul.f32 %v699, %v703
    %v706 = vlaneseq
    %v707 = vshrl.u32 %v706, 7
    %v708 = vsub.s32 4, %v707
    %v709 = vrot.slane %v111, %v708
    %v710 = vadd.f32 %v704, %v709
    %v711 = vadd.f32 %v705, %v709
    %v712 = vmax.f32 %v710, 0.0
    %v713 = vmax.f32 %v711, 0.0
    %v714 = vpack.c.bf16 %v713, %v712
    %v715 = vld [vmem:[#allocation11] sm:$0xf]
    %v716 = vld [vmem:[#allocation11 + $0x4] sm:$0xf]
    %v717 = vld [vmem:[#allocation11 + $0x8] sm:$0xf]
    %v718 = vld [vmem:[#allocation11 + $0xc] sm:$0xf]
    %v719 = vld [vmem:[#allocation11 + $0x10] sm:$0xf]
    %v720 = vld [vmem:[#allocation11 + $0x14] sm:$0xf]
    %v721 = vld [vmem:[#allocation11 + $0x18] sm:$0xf]
    %v722 = vld [vmem:[#allocation11 + $0x1c] sm:$0xf]
    %v723 = vld [vmem:[#allocation11 + $0x20] sm:$0xf]
    %v724 = vld [vmem:[#allocation11 + $0x24] sm:$0xf]
    %v725 = vld [vmem:[#allocation11 + $0x28] sm:$0xf]
    %v726 = vld [vmem:[#allocation11 + $0x2c] sm:$0xf]
    %v727 = vld [vmem:[#allocation11 + $0x30] sm:$0xf]
    %v728 = vld [vmem:[#allocation11 + $0x34] sm:$0xf]
    %v729 = vld [vmem:[#allocation11 + $0x38] sm:$0xf]
    %v730 = vld [vmem:[#allocation11 + $0x3c] sm:$0xf]
    %v731 = vlaneseq
    %v732 = vshrl.u32 %v731, 7
    %v733 = vsub.s32 5, %v732
    %v734 = vrot.slane %v111, %v733
    %v751 = vunpack.c.l.b16 %v715
    %v752 = vunpack.c.l.b16 %v716
    %v753 = vunpack.c.l.b16 %v717
    %v754 = vunpack.c.l.b16 %v718
    %v755 = vunpack.c.l.b16 %v719
    %v756 = vunpack.c.l.b16 %v720
    %v757 = vunpack.c.l.b16 %v721
    %v758 = vunpack.c.l.b16 %v722
    %v759 = vunpack.c.l.b16 %v723
    %v760 = vunpack.c.l.b16 %v724
    %v761 = vunpack.c.l.b16 %v725
    %v762 = vunpack.c.l.b16 %v726
    %v763 = vunpack.c.l.b16 %v727
    %v764 = vunpack.c.l.b16 %v728
    %v765 = vunpack.c.l.b16 %v729
    %v766 = vunpack.c.l.b16 %v730
    %v767 = vpack.c.b16 %v752, %v751
    %v768 = vpack.c.b16 %v754, %v753
    %v769 = vpack.c.b16 %v756, %v755
    %v770 = vpack.c.b16 %v758, %v757
    %v771 = vpack.c.b16 %v760, %v759
    %v772 = vpack.c.b16 %v762, %v761
    %v773 = vpack.c.b16 %v764, %v763
    %v774 = vpack.c.b16 %v766, %v765
    %783 = vmatprep.subr.bf16.mxu0 0
    %784 = vmatpush1.bf16.msra.mxu0 %v767
    %785 = vmatprep.subr.bf16.mxu0 0
    %786 = vmatpush1.bf16.msra.mxu0 %v768
    %787 = vmatprep.subr.bf16.mxu0 0
    %788 = vmatpush1.bf16.msra.mxu0 %v769
    %789 = vmatprep.subr.bf16.mxu0 0
    %790 = vmatpush1.bf16.msra.mxu0 %v770
    %791 = vmatprep.subr.bf16.mxu0 0
    %792 = vmatpush1.bf16.msra.mxu0 %v771
    %793 = vmatprep.subr.bf16.mxu0 0
    %794 = vmatpush1.bf16.msra.mxu0 %v772
    %795 = vmatprep.subr.bf16.mxu0 0
    %796 = vmatpush1.bf16.msra.mxu0 %v773
    %797 = vmatprep.subr.bf16.mxu0 0
    %798 = vmatpush1.bf16.msra.mxu0 %v774
    %799 = vmatprep.subr.bf16.mxu0 0
    %800 = vmatpush1.bf16.msra.mxu0 0
    %801 = vmatprep.subr.bf16.mxu0 0
    %802 = vmatpush1.bf16.msra.mxu0 0
    %803 = vmatprep.subr.bf16.mxu0 0
    %804 = vmatpush1.bf16.msra.mxu0 0
    %805 = vmatprep.subr.bf16.mxu0 0
    %806 = vmatpush1.bf16.msra.mxu0 0
    %807 = vmatprep.subr.bf16.mxu0 0
    %808 = vmatpush1.bf16.msra.mxu0 0
    %809 = vmatprep.subr.bf16.mxu0 0
    %810 = vmatpush1.bf16.msra.mxu0 0
    %811 = vmatprep.subr.bf16.mxu0 0
    %812 = vmatpush1.bf16.msra.mxu0 0
    %813 = vmatprep.subr.bf16.mxu0 0
    %814 = vmatpush1.bf16.msra.mxu0 0
    %815 = vmatprep.mubr.bf16.mxu0 0
    %816 = vmatmul.mubr.bf16.gmra.mrb[0].mxu0 %v714
    %v817 = vpop.f32.mrb[0].mxu0
    %v818 = vadd.f32 %v734, %v817
    %v819 = vpop.f32.mrb[0].mxu0
    %v820 = vpop.f32.mrb[0].mxu0
    %v821 = vadd.f32 %v734, %v820
    %v822 = vpop.f32.mrb[0].mxu0
    %823 = vdwg.mxu0
    %824 = vst [vmem:[#allocation13] sm:$0xff] %v818
    %825 = vst [vmem:[#allocation13 + $0x8] sm:$0xff] %v821
    // Predicated region
    $region54: #{tpu_custom_call.1} parent=1 // pred_check
      _
    $region55: #{tpu_custom_call.1} parent=1 // pred_check_branch
      %827 = sbr.rel (0) target = $region57
    $region56: #{tpu_custom_call.1} parent=1 // pred_region
      %s829 = ssub.s32 256, 256
      %830 = vsyncadd [#allocation4], %s829
      %s831 = sshll.u32 [#allocation13], 4
      %s832 = int_to_ptr.vmem [resolvable:$true] %s831
      %837 = dma.vmem_to_hbm [thread:$0]  %s832, 256, %s7, [#allocation4], 128, 128, 8
    $region57: #{tpu_custom_call.1} parent=1 // pred_fallthru
      _
    // Predicated region
    $region58: #{tpu_custom_call.1} parent=1 // pred_check
      _
    $region59: #{tpu_custom_call.1} parent=1 // pred_check_branch
      %839 = sbr.rel (0) target = $region61
    $region60: #{tpu_custom_call.1} parent=1 // pred_region
      %840 = dma.done [#allocation4], 256
    $region61: #{tpu_custom_call.1} parent=1 // pred_fallthru
      _
    %841 = vsyncpa [#allocation3], 1
    %842 = vsyncpa [#allocation6], 1
    %843 = vsyncpa [#allocation9], 1
    %844 = vsyncpa [#allocation12], 1
    %845 = vsyncpa [#allocation4], 1

</llo_original>
